<compile_context>
chip_gen: v7x
topology: tpu7x:2x2x1
jax: 0.10.0
libtpu: 0.0.40
codegen_flags: <defaults>
</compile_context>

<pallas_src>
import math

import jax
import jax.numpy as jnp
from jax.experimental import pallas as pl

EMBED_DIM = 16          # config['embed_dim']
NUM_HEADS = 4           # config['num_heads']
HEAD_DIM = EMBED_DIM // NUM_HEADS
BLOCK_SIZE = 2          # config['block_size']  (sequence length T)
BATCH = 4               # config['batch_size']
ROWS = BATCH * BLOCK_SIZE   # 8 rows = whole batch folded, one sublane group


def _pad8(n):
    return (n + 7) // 8 * 8


# 2-D slab layout (sublane offsets, all 8-aligned; lane width = EMBED_DIM).
_OFF_COS = 0
_OFF_SIN = _OFF_COS + _pad8(ROWS)
_OFF_ROT = _OFF_SIN + _pad8(ROWS)
_OFF_WQ = _OFF_ROT + _pad8(EMBED_DIM)
_OFF_WK = _OFF_WQ + _pad8(EMBED_DIM)
_OFF_BQ = _OFF_WK + _pad8(EMBED_DIM)
_OFF_BK = _OFF_BQ + 8
_OFF_BOUT = _OFF_BK + 8
_OFF_MASK = _OFF_BOUT + 8
SLAB_ROWS = _OFF_MASK + _pad8(ROWS)          # 96 rows x 16 lanes


# ----------------------------------------------------------------------------
# Pallas kernel: one invocation processes the whole batch.
# ----------------------------------------------------------------------------
def _mhsa_kernel(x_ref, slab_ref, w3_ref, b3_ref, o_ref):
    H, E, Dh, R = NUM_HEADS, EMBED_DIM, HEAD_DIM, ROWS
    f32 = jnp.float32

    x = x_ref[...].astype(f32)                            # (R, E)

    cos = slab_ref[_OFF_COS:_OFF_COS + R, :]              # (R, E)
    sin = slab_ref[_OFF_SIN:_OFF_SIN + R, :]
    rot = slab_ref[_OFF_ROT:_OFF_ROT + E, :]              # (E, E) rotate_half
    wq = slab_ref[_OFF_WQ:_OFF_WQ + E, :]                 # (E, E)
    wk = slab_ref[_OFF_WK:_OFF_WK + E, :]
    bq = slab_ref[_OFF_BQ:_OFF_BQ + 1, :]                 # (1, E)
    bk = slab_ref[_OFF_BK:_OFF_BK + 1, :]
    b_out = slab_ref[_OFF_BOUT:_OFF_BOUT + 1, :]          # fused bo@Wc + bc
    mask = slab_ref[_OFF_MASK:_OFF_MASK + R, 0:R]         # (R, R) additive

    # Outer q/k projections over the whole folded batch (one matmul each).
    q = jnp.dot(x, wq, preferred_element_type=f32) + bq
    k = jnp.dot(x, wk, preferred_element_type=f32) + bk

    # RoPE: rotate_half(q) == q @ rot (fixed sign/permutation matrix; keeps
    # everything on the MXU at E=16 and avoids lane shuffles).
    q = q * cos + jnp.dot(q, rot, preferred_element_type=f32) * sin
    k = k * cos + jnp.dot(k, rot, preferred_element_type=f32) * sin

    # Head-batched MHA in-projections (heads on the leading/batch axis).
    wqm = w3_ref[0]                                       # (H, E, Dh)
    wkm = w3_ref[1]
    wvf = w3_ref[2]                                       # fused Wv @ Wvm
    woc = w3_ref[3]                                       # fused (Wo@Wc), [h,e,d]
    bqm = b3_ref[0]                                       # (H, 1, Dh)
    bkm = b3_ref[1]
    bvf = b3_ref[2]

    qb = jnp.broadcast_to(q[None], (H, R, E))
    kb = jnp.broadcast_to(k[None], (H, R, E))
    xb = jnp.broadcast_to(x[None], (H, R, E))

    dn_proj = (((2,), (1,)), ((0,), (0,)))                # (H,R,E)@(H,E,Dh)->(H,R,Dh)
    Q = jax.lax.dot_general(qb, wqm, dn_proj, preferred_element_type=f32) + bqm
    K = jax.lax.dot_general(kb, wkm, dn_proj, preferred_element_type=f32) + bkm
    V = jax.lax.dot_general(xb, wvf, dn_proj, preferred_element_type=f32) + bvf

    # Scores for all heads / all batch rows at once; the additive mask kills
    # cross-batch and non-causal lanes, so a single softmax is exact.
    s = jax.lax.dot_general(Q, K, (((2,), (2,)), ((0,), (0,))),
                            preferred_element_type=f32)   # (H, R, R)
    s = s * (1.0 / math.sqrt(Dh)) + mask[None]
    s = s - jnp.max(s, axis=-1, keepdims=True)
    p = jnp.exp(s)
    p = p / jnp.sum(p, axis=-1, keepdims=True)

    ctx = jax.lax.dot_general(p, V, (((2,), (1,)), ((0,), (0,))),
                              preferred_element_type=f32)  # (H, R, Dh)

    # Fused out_proj -> c_proj, applied per head then summed over heads.
    yh = jax.lax.dot_general(ctx, woc, (((2,), (2,)), ((0,), (0,))),
                             preferred_element_type=f32)   # (H, R, E)
    y = jnp.sum(yh, axis=0) + b_out                        # (R, E)
    o_ref[...] = y.astype(o_ref.dtype)


# ----------------------------------------------------------------------------
# Host-side glue: RoPE tables, fusions, operand packing, pallas_call.
# ----------------------------------------------------------------------------
def _rope_tables(T, E, base=10000.0):
    inv_freq = 1.0 / (base ** (jnp.arange(0, E, 2, dtype=jnp.float32) / E))
    pos = jnp.arange(T, dtype=jnp.float32)
    freqs = pos[:, None] * inv_freq[None, :]               # (T, E/2)
    emb = jnp.concatenate([freqs, freqs], axis=-1)         # (T, E)
    return jnp.cos(emb), jnp.sin(emb)


def _rotate_half_matrix(E):
    half = E // 2
    eye = jnp.eye(half, dtype=jnp.float32)
    R = jnp.zeros((E, E), jnp.float32)
    R = R.at[half:, :half].set(-eye)   # (q @ R)[:, :half] = -q[:, half:]
    R = R.at[:half, half:].set(eye)    # (q @ R)[:, half:] =  q[:, :half]
    return R


def init_params(key):
    """Deterministic init.  Weights stored pre-transposed: (in, out)."""
    def linear(k, fan_in, fan_out):
        k1, k2 = jax.random.split(k)
        bound = 1.0 / math.sqrt(fan_in)
        w = jax.random.uniform(k1, (fan_in, fan_out), jnp.float32, -bound, bound)
        b = jax.random.uniform(k2, (1, fan_out), jnp.float32, -bound, bound)
        return w, b

    keys = jax.random.split(key, 8)
    p = {}
    p['wq'], p['bq'] = linear(keys[0], EMBED_DIM, EMBED_DIM)   # q_attn
    p['wk'], p['bk'] = linear(keys[1], EMBED_DIM, EMBED_DIM)   # k_attn
    p['wv'], p['bv'] = linear(keys[2], EMBED_DIM, EMBED_DIM)   # v_attn
    p['wqm'], p['bqm'] = linear(keys[3], EMBED_DIM, EMBED_DIM)  # MHA in_proj (Q)
    p['wkm'], p['bkm'] = linear(keys[4], EMBED_DIM, EMBED_DIM)  # MHA in_proj (K)
    p['wvm'], p['bvm'] = linear(keys[5], EMBED_DIM, EMBED_DIM)  # MHA in_proj (V)
    p['wo'], p['bo'] = linear(keys[6], EMBED_DIM, EMBED_DIM)    # MHA out_proj
    p['wc'], p['bc'] = linear(keys[7], EMBED_DIM, EMBED_DIM)    # c_proj
    return p


def multi_head_self_attention(x, p):
    B, T, E = x.shape
    H, Dh = NUM_HEADS, HEAD_DIM
    R = B * T
    assert (B, T, E) == (BATCH, BLOCK_SIZE, EMBED_DIM)

    # --- algebraic fusions (exact algebra, f32) ---
    wvf = p['wv'] @ p['wvm']                       # v_attn -> MHA V in_proj
    bvf = p['bv'] @ p['wvm'] + p['bvm']
    woc = p['wo'] @ p['wc']                        # MHA out_proj -> c_proj
    b_out = p['bo'] @ p['wc'] + p['bc']

    # per-head layouts: (H, E, Dh); woc stored as [h, e, d] = woc[h*Dh + d, e]
    def split_heads(w):                            # (E, E) -> (H, E, Dh)
        return w.reshape(E, H, Dh).transpose(1, 0, 2)

    def split_heads_b(b):                          # (1, E) -> (H, 1, Dh)
        return b.reshape(1, H, Dh).transpose(1, 0, 2)

    w3 = jnp.stack([split_heads(p['wqm']), split_heads(p['wkm']),
                    split_heads(wvf),
                    woc.reshape(H, Dh, E).transpose(0, 2, 1)], axis=0)  # (4,H,E,Dh)
    b3 = jnp.stack([split_heads_b(p['bqm']), split_heads_b(p['bkm']),
                    split_heads_b(bvf)], axis=0)                        # (3,H,1,Dh)

    # --- RoPE tables (tiled over batch), rotate_half matrix, block-causal mask ---
    cos, sin = _rope_tables(T, E)
    cos2, sin2 = jnp.tile(cos, (B, 1)), jnp.tile(sin, (B, 1))           # (R, E)
    rot = _rotate_half_matrix(E)

    r = jnp.arange(R)
    bi, ti = r // T, r % T
    valid = (bi[:, None] == bi[None, :]) & (ti[None, :] <= ti[:, None])
    mask = jnp.where(valid, 0.0, -1e30).astype(jnp.float32)             # (R, R)

    # --- pack the 2-D operands into one slab (one DMA instead of ~15) ---
    slab = jnp.zeros((SLAB_ROWS, E), jnp.float32)
    slab = slab.at[_OFF_COS:_OFF_COS + R].set(cos2)
    slab = slab.at[_OFF_SIN:_OFF_SIN + R].set(sin2)
    slab = slab.at[_OFF_ROT:_OFF_ROT + E].set(rot)
    slab = slab.at[_OFF_WQ:_OFF_WQ + E].set(p['wq'])
    slab = slab.at[_OFF_WK:_OFF_WK + E].set(p['wk'])
    slab = slab.at[_OFF_BQ].set(p['bq'][0])
    slab = slab.at[_OFF_BK].set(p['bk'][0])
    slab = slab.at[_OFF_BOUT].set(b_out[0])
    slab = slab.at[_OFF_MASK:_OFF_MASK + R, :R].set(mask)

    x2 = x.reshape(R, E)
    y2 = pl.pallas_call(
        _mhsa_kernel,
        out_shape=jax.ShapeDtypeStruct((R, E), x.dtype),
    )(x2, slab, w3, b3)
    return y2.reshape(B, T, E)


# ----------------------------------------------------------------------------
# Pure-JAX reference (mirrors the PyTorch forward, eval mode, unfused).
# ----------------------------------------------------------------------------
def reference(x, p):
    B, T, E = x.shape
    H, Dh = NUM_HEADS, HEAD_DIM
    cos, sin = _rope_tables(T, E)
    idx = jnp.arange(T)
    mask = jnp.where(idx[None, :] > idx[:, None], -1e30, 0.0)

    q = x @ p['wq'] + p['bq']
    k = x @ p['wk'] + p['bk']
    v = x @ p['wv'] + p['bv']

    def rot_half(a):
        h = a.shape[-1] // 2
        return jnp.concatenate([-a[..., h:], a[..., :h]], axis=-1)

    q = q * cos + rot_half(q) * sin
    k = k * cos + rot_half(k) * sin

    Q = (q @ p['wqm'] + p['bqm']).reshape(B, T, H, Dh).transpose(0, 2, 1, 3)
    K = (k @ p['wkm'] + p['bkm']).reshape(B, T, H, Dh).transpose(0, 2, 1, 3)
    V = (v @ p['wvm'] + p['bvm']).reshape(B, T, H, Dh).transpose(0, 2, 1, 3)

    s = jnp.einsum('bhqd,bhkd->bhqk', Q, K) / math.sqrt(Dh) + mask
    a = jax.nn.softmax(s, axis=-1)
    ctx = jnp.einsum('bhqk,bhkd->bhqd', a, V).transpose(0, 2, 1, 3).reshape(B, T, E)
    out = ctx @ p['wo'] + p['bo']
    return out @ p['wc'] + p['bc']


if __name__ == "__main__":
    key = jax.random.PRNGKey(0)
    k_x, k_p = jax.random.split(key)
    x = jax.random.normal(k_x, (BATCH, BLOCK_SIZE, EMBED_DIM), jnp.float32)
    params = init_params(k_p)

    y = multi_head_self_attention(x, params)
    y = jax.block_until_ready(y)

    y_ref = reference(x, params)
    assert y.shape == (BATCH, BLOCK_SIZE, EMBED_DIM)
    assert jnp.allclose(y, y_ref, rtol=2e-4, atol=2e-4)
    print("KERNEL_OK")
</pallas_src>

<mosaic_0001>
module attributes {stable_mosaic.version = 11 : i64} {
  func.func @_mhsa_kernel(%arg0: memref<8x16xf32, #tpu.memory_space<vmem>>, %arg1: memref<96x16xf32, #tpu.memory_space<vmem>>, %arg2: memref<4x4x16x4xf32, #tpu.memory_space<vmem>>, %arg3: memref<3x4x1x4xf32, #tpu.memory_space<vmem>>, %arg4: memref<8x16xf32, #tpu.memory_space<vmem>>) attributes {dimension_semantics = [], scalar_prefetch = 0 : i64, scratch_operands = 0 : i64, tpu.core_type = #tpu.core_type<tc>} {
    %c0 = arith.constant 0 : index
    %c0_0 = arith.constant 0 : index
    %0 = vector.load %arg0[%c0, %c0_0] : memref<8x16xf32, #tpu.memory_space<vmem>>, vector<8x16xf32>
    %c0_1 = arith.constant 0 : index
    %c0_2 = arith.constant 0 : index
    %1 = vector.load %arg1[%c0_1, %c0_2] : memref<96x16xf32, #tpu.memory_space<vmem>>, vector<8x16xf32>
    %c8 = arith.constant 8 : index
    %c0_3 = arith.constant 0 : index
    %2 = vector.load %arg1[%c8, %c0_3] : memref<96x16xf32, #tpu.memory_space<vmem>>, vector<8x16xf32>
    %c16 = arith.constant 16 : index
    %c0_4 = arith.constant 0 : index
    %3 = vector.load %arg1[%c16, %c0_4] : memref<96x16xf32, #tpu.memory_space<vmem>>, vector<16x16xf32>
    %c32 = arith.constant 32 : index
    %c0_5 = arith.constant 0 : index
    %4 = vector.load %arg1[%c32, %c0_5] : memref<96x16xf32, #tpu.memory_space<vmem>>, vector<16x16xf32>
    %c48 = arith.constant 48 : index
    %c0_6 = arith.constant 0 : index
    %5 = vector.load %arg1[%c48, %c0_6] : memref<96x16xf32, #tpu.memory_space<vmem>>, vector<16x16xf32>
    %c64 = arith.constant 64 : index
    %c0_7 = arith.constant 0 : index
    %6 = vector.load %arg1[%c64, %c0_7] : memref<96x16xf32, #tpu.memory_space<vmem>>, vector<1x16xf32>
    %c72 = arith.constant 72 : index
    %c0_8 = arith.constant 0 : index
    %7 = vector.load %arg1[%c72, %c0_8] : memref<96x16xf32, #tpu.memory_space<vmem>>, vector<1x16xf32>
    %c80 = arith.constant 80 : index
    %c0_9 = arith.constant 0 : index
    %8 = vector.load %arg1[%c80, %c0_9] : memref<96x16xf32, #tpu.memory_space<vmem>>, vector<1x16xf32>
    %c88 = arith.constant 88 : index
    %c0_10 = arith.constant 0 : index
    %9 = vector.load %arg1[%c88, %c0_10] : memref<96x16xf32, #tpu.memory_space<vmem>>, vector<8x8xf32>
    %cst = arith.constant dense<0.000000e+00> : vector<8x16xf32>
    %10 = tpu.matmul %0, %4, %cst {dimension_numbers = #tpu.dot_dimension_numbers<[1], [0], [0], [1], [0, 0, 1, 1], [], []>} : vector<8x16xf32>, vector<16x16xf32>, vector<8x16xf32> -> vector<8x16xf32>
    %11 = vector.broadcast %6 : vector<1x16xf32> to vector<8x16xf32>
    %12 = arith.addf %10, %11 : vector<8x16xf32>
    %cst_11 = arith.constant dense<0.000000e+00> : vector<8x16xf32>
    %13 = tpu.matmul %0, %5, %cst_11 {dimension_numbers = #tpu.dot_dimension_numbers<[1], [0], [0], [1], [0, 0, 1, 1], [], []>} : vector<8x16xf32>, vector<16x16xf32>, vector<8x16xf32> -> vector<8x16xf32>
    %14 = vector.broadcast %7 : vector<1x16xf32> to vector<8x16xf32>
    %15 = arith.addf %13, %14 : vector<8x16xf32>
    %16 = arith.mulf %12, %1 : vector<8x16xf32>
    %cst_12 = arith.constant dense<0.000000e+00> : vector<8x16xf32>
    %17 = tpu.matmul %12, %3, %cst_12 {dimension_numbers = #tpu.dot_dimension_numbers<[1], [0], [0], [1], [0, 0, 1, 1], [], []>} : vector<8x16xf32>, vector<16x16xf32>, vector<8x16xf32> -> vector<8x16xf32>
    %18 = arith.mulf %17, %2 : vector<8x16xf32>
    %19 = arith.addf %16, %18 : vector<8x16xf32>
    %20 = arith.mulf %15, %1 : vector<8x16xf32>
    %cst_13 = arith.constant dense<0.000000e+00> : vector<8x16xf32>
    %21 = tpu.matmul %15, %3, %cst_13 {dimension_numbers = #tpu.dot_dimension_numbers<[1], [0], [0], [1], [0, 0, 1, 1], [], []>} : vector<8x16xf32>, vector<16x16xf32>, vector<8x16xf32> -> vector<8x16xf32>
    %22 = arith.mulf %21, %2 : vector<8x16xf32>
    %23 = arith.addf %20, %22 : vector<8x16xf32>
    %c0_14 = arith.constant 0 : index
    %c0_15 = arith.constant 0 : index
    %c0_16 = arith.constant 0 : index
    %c0_17 = arith.constant 0 : index
    %24 = vector.load %arg2[%c0_14, %c0_15, %c0_16, %c0_17] : memref<4x4x16x4xf32, #tpu.memory_space<vmem>>, vector<1x4x16x4xf32>
    %25 = vector.shape_cast %24 : vector<1x4x16x4xf32> to vector<4x16x4xf32>
    %c1 = arith.constant 1 : index
    %c0_18 = arith.constant 0 : index
    %c0_19 = arith.constant 0 : index
    %c0_20 = arith.constant 0 : index
    %26 = vector.load %arg2[%c1, %c0_18, %c0_19, %c0_20] : memref<4x4x16x4xf32, #tpu.memory_space<vmem>>, vector<1x4x16x4xf32>
    %27 = vector.shape_cast %26 : vector<1x4x16x4xf32> to vector<4x16x4xf32>
    %c2 = arith.constant 2 : index
    %c0_21 = arith.constant 0 : index
    %c0_22 = arith.constant 0 : index
    %c0_23 = arith.constant 0 : index
    %28 = vector.load %arg2[%c2, %c0_21, %c0_22, %c0_23] : memref<4x4x16x4xf32, #tpu.memory_space<vmem>>, vector<1x4x16x4xf32>
    %29 = vector.shape_cast %28 : vector<1x4x16x4xf32> to vector<4x16x4xf32>
    %c3 = arith.constant 3 : index
    %c0_24 = arith.constant 0 : index
    %c0_25 = arith.constant 0 : index
    %c0_26 = arith.constant 0 : index
    %30 = vector.load %arg2[%c3, %c0_24, %c0_25, %c0_26] : memref<4x4x16x4xf32, #tpu.memory_space<vmem>>, vector<1x4x16x4xf32>
    %31 = vector.shape_cast %30 : vector<1x4x16x4xf32> to vector<4x16x4xf32>
    %c0_27 = arith.constant 0 : index
    %c0_28 = arith.constant 0 : index
    %c0_29 = arith.constant 0 : index
    %c0_30 = arith.constant 0 : index
    %32 = vector.load %arg3[%c0_27, %c0_28, %c0_29, %c0_30] : memref<3x4x1x4xf32, #tpu.memory_space<vmem>>, vector<1x4x1x4xf32>
    %33 = vector.shape_cast %32 : vector<1x4x1x4xf32> to vector<4x1x4xf32>
    %c1_31 = arith.constant 1 : index
    %c0_32 = arith.constant 0 : index
    %c0_33 = arith.constant 0 : index
    %c0_34 = arith.constant 0 : index
    %34 = vector.load %arg3[%c1_31, %c0_32, %c0_33, %c0_34] : memref<3x4x1x4xf32, #tpu.memory_space<vmem>>, vector<1x4x1x4xf32>
    %35 = vector.shape_cast %34 : vector<1x4x1x4xf32> to vector<4x1x4xf32>
    %c2_35 = arith.constant 2 : index
    %c0_36 = arith.constant 0 : index
    %c0_37 = arith.constant 0 : index
    %c0_38 = arith.constant 0 : index
    %36 = vector.load %arg3[%c2_35, %c0_36, %c0_37, %c0_38] : memref<3x4x1x4xf32, #tpu.memory_space<vmem>>, vector<1x4x1x4xf32>
    %37 = vector.shape_cast %36 : vector<1x4x1x4xf32> to vector<4x1x4xf32>
    %38 = vector.shape_cast %19 : vector<8x16xf32> to vector<1x8x16xf32>
    %39 = vector.shape_cast %38 : vector<1x8x16xf32> to vector<1x8x16xf32>
    %40 = vector.broadcast %39 : vector<1x8x16xf32> to vector<4x8x16xf32>
    %41 = vector.shape_cast %23 : vector<8x16xf32> to vector<1x8x16xf32>
    %42 = vector.shape_cast %41 : vector<1x8x16xf32> to vector<1x8x16xf32>
    %43 = vector.broadcast %42 : vector<1x8x16xf32> to vector<4x8x16xf32>
    %44 = vector.shape_cast %0 : vector<8x16xf32> to vector<1x8x16xf32>
    %45 = vector.shape_cast %44 : vector<1x8x16xf32> to vector<1x8x16xf32>
    %46 = vector.broadcast %45 : vector<1x8x16xf32> to vector<4x8x16xf32>
    %cst_39 = arith.constant dense<0.000000e+00> : vector<4x8x4xf32>
    %47 = tpu.matmul %40, %25, %cst_39 {dimension_numbers = #tpu.dot_dimension_numbers<[2], [1], [1], [2], [0, 0, 0, 1, 1, 2], [0], [0]>} : vector<4x8x16xf32>, vector<4x16x4xf32>, vector<4x8x4xf32> -> vector<4x8x4xf32>
    %48 = vector.broadcast %33 : vector<4x1x4xf32> to vector<4x8x4xf32>
    %49 = arith.addf %47, %48 : vector<4x8x4xf32>
    %cst_40 = arith.constant dense<0.000000e+00> : vector<4x8x4xf32>
    %50 = tpu.matmul %43, %27, %cst_40 {dimension_numbers = #tpu.dot_dimension_numbers<[2], [1], [1], [2], [0, 0, 0, 1, 1, 2], [0], [0]>} : vector<4x8x16xf32>, vector<4x16x4xf32>, vector<4x8x4xf32> -> vector<4x8x4xf32>
    %51 = vector.broadcast %35 : vector<4x1x4xf32> to vector<4x8x4xf32>
    %52 = arith.addf %50, %51 : vector<4x8x4xf32>
    %cst_41 = arith.constant dense<0.000000e+00> : vector<4x8x4xf32>
    %53 = tpu.matmul %46, %29, %cst_41 {dimension_numbers = #tpu.dot_dimension_numbers<[2], [1], [1], [2], [0, 0, 0, 1, 1, 2], [0], [0]>} : vector<4x8x16xf32>, vector<4x16x4xf32>, vector<4x8x4xf32> -> vector<4x8x4xf32>
    %54 = vector.broadcast %37 : vector<4x1x4xf32> to vector<4x8x4xf32>
    %55 = arith.addf %53, %54 : vector<4x8x4xf32>
    %cst_42 = arith.constant dense<0.000000e+00> : vector<4x8x8xf32>
    %56 = tpu.matmul %49, %52, %cst_42 {dimension_numbers = #tpu.dot_dimension_numbers<[2], [2], [1], [1], [0, 0, 0, 1, 1, 1], [0], [0]>} : vector<4x8x4xf32>, vector<4x8x4xf32>, vector<4x8x8xf32> -> vector<4x8x8xf32>
    %cst_43 = arith.constant 5.000000e-01 : f32
    %57 = vector.broadcast %cst_43 : f32 to vector<4x8x8xf32>
    %58 = arith.mulf %56, %57 : vector<4x8x8xf32>
    %59 = vector.shape_cast %9 : vector<8x8xf32> to vector<1x8x8xf32>
    %60 = vector.broadcast %59 : vector<1x8x8xf32> to vector<4x8x8xf32>
    %61 = arith.addf %58, %60 : vector<4x8x8xf32>
    %cst_44 = arith.constant dense<0xFF800000> : vector<4x8xf32>
    %62 = vector.multi_reduction <maximumf>, %61, %cst_44 [2] : vector<4x8x8xf32> to vector<4x8xf32>
    %63 = vector.shape_cast %62 : vector<4x8xf32> to vector<4x8x1xf32>
    %64 = vector.broadcast %63 : vector<4x8x1xf32> to vector<4x8x8xf32>
    %65 = arith.subf %61, %64 : vector<4x8x8xf32>
    %66 = math.exp %65 : vector<4x8x8xf32>
    %cst_45 = arith.constant dense<0.000000e+00> : vector<4x8xf32>
    %67 = vector.multi_reduction <add>, %66, %cst_45 [2] : vector<4x8x8xf32> to vector<4x8xf32>
    %68 = vector.shape_cast %67 : vector<4x8xf32> to vector<4x8x1xf32>
    %69 = vector.broadcast %68 : vector<4x8x1xf32> to vector<4x8x8xf32>
    %70 = arith.divf %66, %69 : vector<4x8x8xf32>
    %cst_46 = arith.constant dense<0.000000e+00> : vector<4x8x4xf32>
    %71 = tpu.matmul %70, %55, %cst_46 {dimension_numbers = #tpu.dot_dimension_numbers<[2], [1], [1], [2], [0, 0, 0, 1, 1, 2], [0], [0]>} : vector<4x8x8xf32>, vector<4x8x4xf32>, vector<4x8x4xf32> -> vector<4x8x4xf32>
    %cst_47 = arith.constant dense<0.000000e+00> : vector<4x8x16xf32>
    %72 = tpu.matmul %71, %31, %cst_47 {dimension_numbers = #tpu.dot_dimension_numbers<[2], [2], [1], [1], [0, 0, 0, 1, 1, 1], [0], [0]>} : vector<4x8x4xf32>, vector<4x16x4xf32>, vector<4x8x16xf32> -> vector<4x8x16xf32>
    %cst_48 = arith.constant dense<0.000000e+00> : vector<8x16xf32>
    %73 = vector.multi_reduction <add>, %72, %cst_48 [0] : vector<4x8x16xf32> to vector<8x16xf32>
    %74 = vector.broadcast %8 : vector<1x16xf32> to vector<8x16xf32>
    %75 = arith.addf %73, %74 : vector<8x16xf32>
    %c0_49 = arith.constant 0 : index
    %c0_50 = arith.constant 0 : index
    %76 = vector.load %arg4[%c0_49, %c0_50] : memref<8x16xf32, #tpu.memory_space<vmem>>, vector<8x16xf32>
    tpu.vector_store %arg4[%c0_49, %c0_50], %75 {strides = array<i32>} : memref<8x16xf32, #tpu.memory_space<vmem>>, vector<8x16xf32>,
    return
  }
}

</mosaic_0001>

<llo_original>
// kernel: tpu_custom_call.1
$region0: #{tpu_custom_call.1}
  #allocation0 [shape = 'u32[]', space=smem, size = 0x4, offset = 0x4, fixed_abs, tag = 'smem constant byte address 0x4 - core index']
  #allocation1 [shape = 'u32[144,128]{1,0:T(1,128)}', space=vmem, size = 0x12000, scoped, tag = 'internal scratch']
  %s0 = inlined_call_operand.vmem [shape: f32[8,16], index: 0, kind: input, shape index: {}]
  %s1 = inlined_call_operand.vmem [shape: f32[96,16], index: 1, kind: input, shape index: {}]
  %s2 = inlined_call_operand.vmem [shape: f32[4,4,16,4], index: 2, kind: input, shape index: {}]
  %s3 = inlined_call_operand.vmem [shape: f32[3,4,1,4], index: 3, kind: input, shape index: {}]
  %s4 = inlined_call_operand.hbm [shape: f32[8,16], index: 4, kind: output, shape index: {}]
  %s5 = sld [smem:[#allocation0]]
  $region26: #{tpu_custom_call.1} parent=0
    _
  %s7 = ssub.s32 1, %s5
  %s8 = scalar_select 0, %s7, %s5
  $region1: #{tpu_custom_call.1} parent=0
    #allocation2 [shape = 'u8[4096]{0}', space=vmem, size = 0x1000, scoped, tag = 'output window, operand 0, single buffered']
    #allocation3 [shape = 's32[1]{0}', space=sflag, size = 0x4, scoped, tag = 'scoped memory for tpu_custom_call.1']
    %9 = vsyncpa [#allocation3], 0
    // Predicated region
    $region2: #{tpu_custom_call.1} parent=1 // pred_check
      _
    $region3: #{tpu_custom_call.1} parent=1 // pred_check_branch
      %11 = sbr.rel (0) target = $region5
    $region4: #{tpu_custom_call.1} parent=1 // pred_region
      _
    $region5: #{tpu_custom_call.1} parent=1 // pred_fallthru
      _
    // Predicated region
    $region6: #{tpu_custom_call.1} parent=1 // pred_check
      _
    $region7: #{tpu_custom_call.1} parent=1 // pred_check_branch
      %13 = sbr.rel (0) target = $region9
    $region8: #{tpu_custom_call.1} parent=1 // pred_region
      _
    $region9: #{tpu_custom_call.1} parent=1 // pred_fallthru
      _
    // Predicated region
    $region10: #{tpu_custom_call.1} parent=1 // pred_check
      _
    $region11: #{tpu_custom_call.1} parent=1 // pred_check_branch
      %15 = sbr.rel (0) target = $region13
    $region12: #{tpu_custom_call.1} parent=1 // pred_region
      _
    $region13: #{tpu_custom_call.1} parent=1 // pred_fallthru
      _
    // Predicated region
    $region14: #{tpu_custom_call.1} parent=1 // pred_check
      _
    $region15: #{tpu_custom_call.1} parent=1 // pred_check_branch
      %17 = sbr.rel (0) target = $region17
    $region16: #{tpu_custom_call.1} parent=1 // pred_region
      _
    $region17: #{tpu_custom_call.1} parent=1 // pred_fallthru
      _
    %v18 = vld [vmem:[%s0] sm:$0xff]
    %v19 = vld [vmem:[%s1] sm:$0xff]
    %v20 = vld [vmem:[%s1 + $0x8] sm:$0xff]
    %v21 = vld [vmem:[%s1 + $0x10] sm:$0xff]
    %v22 = vld [vmem:[%s1 + $0x18] sm:$0xff]
    %v23 = vld [vmem:[%s1 + $0x20] sm:$0xff]
    %v24 = vld [vmem:[%s1 + $0x28] sm:$0xff]
    %v25 = vld [vmem:[%s1 + $0x30] sm:$0xff]
    %v26 = vld [vmem:[%s1 + $0x38] sm:$0xff]
    %v27 = vld [vmem:[%s1 + $0x40] sm:$0x1]
    %v28 = vld [vmem:[%s1 + $0x48] sm:$0x1]
    %v29 = vld [vmem:[%s1 + $0x50] sm:$0x1]
    %v30 = vld [vmem:[%s1 + $0x58] sm:$0xff]
    %v31 = vlaneseq
    %v32 = vshrl.u32 %v31, 7
    %v33 = vsub.s32 0, %v32
    %v34 = vrot.slane %v27, %v33
    %vm35 = vcmask 130048
    %v37 = vsel %vm35, %v18, 0
    %39 = vmatprep.subr.mxu0 0.0
    %40 = vmatpush1.msra.mxu0 %v23
    %41 = vmatprep.subr.mxu0 0.0
    %42 = vmatpush1.msra.mxu0 %v24
    %43 = vmatprep.subr.mxu0 0.0
    %44 = vmatpush1.msra.mxu0 0.0
    %45 = vmatprep.subr.mxu0 0.0
    %46 = vmatpush1.msra.mxu0 0.0
    %47 = vmatprep.subr.mxu0 0.0
    %48 = vmatpush1.msra.mxu0 0.0
    %49 = vmatprep.subr.mxu0 0.0
    %50 = vmatpush1.msra.mxu0 0.0
    %51 = vmatprep.subr.mxu0 0.0
    %52 = vmatpush1.msra.mxu0 0.0
    %53 = vmatprep.subr.mxu0 0.0
    %54 = vmatpush1.msra.mxu0 0.0
    %55 = vmatprep.subr.mxu0 0.0
    %56 = vmatpush1.msra.mxu0 0.0
    %57 = vmatprep.subr.mxu0 0.0
    %58 = vmatpush1.msra.mxu0 0.0
    %59 = vmatprep.subr.mxu0 0.0
    %60 = vmatpush1.msra.mxu0 0.0
    %61 = vmatprep.subr.mxu0 0.0
    %62 = vmatpush1.msra.mxu0 0.0
    %63 = vmatprep.subr.mxu0 0.0
    %64 = vmatpush1.msra.mxu0 0.0
    %65 = vmatprep.subr.mxu0 0.0
    %66 = vmatpush1.msra.mxu0 0.0
    %67 = vmatprep.subr.mxu0 0.0
    %68 = vmatpush1.msra.mxu0 0.0
    %69 = vmatprep.subr.mxu0 0.0
    %70 = vmatpush1.msra.mxu0 0.0
    %71 = vmatprep.subr.mxu0 0.0
    %72 = vmatpush1.msra.mxu0 0.0
    %73 = vmatprep.subr.mxu0 0.0
    %74 = vmatpush1.msra.mxu0 0.0
    %75 = vmatprep.subr.mxu0 0.0
    %76 = vmatpush1.msra.mxu0 0.0
    %77 = vmatprep.subr.mxu0 0.0
    %78 = vmatpush1.msra.mxu0 0.0
    %79 = vmatprep.subr.mxu0 0.0
    %80 = vmatpush1.msra.mxu0 0.0
    %81 = vmatprep.subr.mxu0 0.0
    %82 = vmatpush1.msra.mxu0 0.0
    %83 = vmatprep.subr.mxu0 0.0
    %84 = vmatpush1.msra.mxu0 0.0
    %85 = vmatprep.subr.mxu0 0.0
    %86 = vmatpush1.msra.mxu0 0.0
    %87 = vmatprep.subr.mxu0 0.0
    %88 = vmatpush1.msra.mxu0 0.0
    %89 = vmatprep.subr.mxu0 0.0
    %90 = vmatpush1.msra.mxu0 0.0
    %91 = vmatprep.subr.mxu0 0.0
    %92 = vmatpush1.msra.mxu0 0.0
    %93 = vmatprep.subr.mxu0 0.0
    %94 = vmatpush1.msra.mxu0 0.0
    %95 = vmatprep.subr.mxu0 0.0
    %96 = vmatpush1.msra.mxu0 0.0
    %97 = vmatprep.subr.mxu0 0.0
    %98 = vmatpush1.msra.mxu0 0.0
    %99 = vmatprep.subr.mxu0 0.0
    %100 = vmatpush1.msra.mxu0 0.0
    %101 = vmatprep.subr.mxu0 0.0
    %102 = vmatpush1.msra.mxu0 0.0
    %103 = vmatprep.mubr.f32.mxu0 0.0
    %104 = vmatmul.mubr.f32.gmra.mrb[0].mxu0 %v37
    %v105 = vpop.f32.mrb[0].mxu0
    %v106 = vadd.f32 %v34, %v105
    %v107 = vpop.f32.mrb[0].mxu0
    %108 = vdwg.mxu0
    %v109 = vlaneseq
    %v110 = vshrl.u32 %v109, 7
    %v111 = vsub.s32 0, %v110
    %v112 = vrot.slane %v28, %v111
    %113 = vmatprep.subr.mxu0 0.0
    %114 = vmatpush1.msra.mxu0 %v25
    %115 = vmatprep.subr.mxu0 0.0
    %116 = vmatpush1.msra.mxu0 %v26
    %117 = vmatprep.subr.mxu0 0.0
    %118 = vmatpush1.msra.mxu0 0.0
    %119 = vmatprep.subr.mxu0 0.0
    %120 = vmatpush1.msra.mxu0 0.0
    %121 = vmatprep.subr.mxu0 0.0
    %122 = vmatpush1.msra.mxu0 0.0
    %123 = vmatprep.subr.mxu0 0.0
    %124 = vmatpush1.msra.mxu0 0.0
    %125 = vmatprep.subr.mxu0 0.0
    %126 = vmatpush1.msra.mxu0 0.0
    %127 = vmatprep.subr.mxu0 0.0
    %128 = vmatpush1.msra.mxu0 0.0
    %129 = vmatprep.subr.mxu0 0.0
    %130 = vmatpush1.msra.mxu0 0.0
    %131 = vmatprep.subr.mxu0 0.0
    %132 = vmatpush1.msra.mxu0 0.0
    %133 = vmatprep.subr.mxu0 0.0
    %134 = vmatpush1.msra.mxu0 0.0
    %135 = vmatprep.subr.mxu0 0.0
    %136 = vmatpush1.msra.mxu0 0.0
    %137 = vmatprep.subr.mxu0 0.0
    %138 = vmatpush1.msra.mxu0 0.0
    %139 = vmatprep.subr.mxu0 0.0
    %140 = vmatpush1.msra.mxu0 0.0
    %141 = vmatprep.subr.mxu0 0.0
    %142 = vmatpush1.msra.mxu0 0.0
    %143 = vmatprep.subr.mxu0 0.0
    %144 = vmatpush1.msra.mxu0 0.0
    %145 = vmatprep.subr.mxu0 0.0
    %146 = vmatpush1.msra.mxu0 0.0
    %147 = vmatprep.subr.mxu0 0.0
    %148 = vmatpush1.msra.mxu0 0.0
    %149 = vmatprep.subr.mxu0 0.0
    %150 = vmatpush1.msra.mxu0 0.0
    %151 = vmatprep.subr.mxu0 0.0
    %152 = vmatpush1.msra.mxu0 0.0
    %153 = vmatprep.subr.mxu0 0.0
    %154 = vmatpush1.msra.mxu0 0.0
    %155 = vmatprep.subr.mxu0 0.0
    %156 = vmatpush1.msra.mxu0 0.0
    %157 = vmatprep.subr.mxu0 0.0
    %158 = vmatpush1.msra.mxu0 0.0
    %159 = vmatprep.subr.mxu0 0.0
    %160 = vmatpush1.msra.mxu0 0.0
    %161 = vmatprep.subr.mxu0 0.0
    %162 = vmatpush1.msra.mxu0 0.0
    %163 = vmatprep.subr.mxu0 0.0
    %164 = vmatpush1.msra.mxu0 0.0
    %165 = vmatprep.subr.mxu0 0.0
    %166 = vmatpush1.msra.mxu0 0.0
    %167 = vmatprep.subr.mxu0 0.0
    %168 = vmatpush1.msra.mxu0 0.0
    %169 = vmatprep.subr.mxu0 0.0
    %170 = vmatpush1.msra.mxu0 0.0
    %171 = vmatprep.subr.mxu0 0.0
    %172 = vmatpush1.msra.mxu0 0.0
    %173 = vmatprep.subr.mxu0 0.0
    %174 = vmatpush1.msra.mxu0 0.0
    %175 = vmatprep.subr.mxu0 0.0
    %176 = vmatpush1.msra.mxu0 0.0
    %177 = vmatprep.mubr.f32.mxu0 0.0
    %178 = vmatmul.mubr.f32.gmra.mrb[0].mxu0 %v37
    %v179 = vpop.f32.mrb[0].mxu0
    %v180 = vadd.f32 %v112, %v179
    %v181 = vpop.f32.mrb[0].mxu0
    %182 = vdwg.mxu0
    %v183 = vmul.f32 %v106, %v19
    %v185 = vsel %vm35, %v106, 0
    %187 = vmatprep.subr.mxu0 0.0
    %188 = vmatpush1.msra.mxu0 %v21
    %189 = vmatprep.subr.mxu0 0.0
    %190 = vmatpush1.msra.mxu0 %v22
    %191 = vmatprep.subr.mxu0 0.0
    %192 = vmatpush1.msra.mxu0 0.0
    %193 = vmatprep.subr.mxu0 0.0
    %194 = vmatpush1.msra.mxu0 0.0
    %195 = vmatprep.subr.mxu0 0.0
    %196 = vmatpush1.msra.mxu0 0.0
    %197 = vmatprep.subr.mxu0 0.0
    %198 = vmatpush1.msra.mxu0 0.0
    %199 = vmatprep.subr.mxu0 0.0
    %200 = vmatpush1.msra.mxu0 0.0
    %201 = vmatprep.subr.mxu0 0.0
    %202 = vmatpush1.msra.mxu0 0.0
    %203 = vmatprep.subr.mxu0 0.0
    %204 = vmatpush1.msra.mxu0 0.0
    %205 = vmatprep.subr.mxu0 0.0
    %206 = vmatpush1.msra.mxu0 0.0
    %207 = vmatprep.subr.mxu0 0.0
    %208 = vmatpush1.msra.mxu0 0.0
    %209 = vmatprep.subr.mxu0 0.0
    %210 = vmatpush1.msra.mxu0 0.0
    %211 = vmatprep.subr.mxu0 0.0
    %212 = vmatpush1.msra.mxu0 0.0
    %213 = vmatprep.subr.mxu0 0.0
    %214 = vmatpush1.msra.mxu0 0.0
    %215 = vmatprep.subr.mxu0 0.0
    %216 = vmatpush1.msra.mxu0 0.0
    %217 = vmatprep.subr.mxu0 0.0
    %218 = vmatpush1.msra.mxu0 0.0
    %219 = vmatprep.subr.mxu0 0.0
    %220 = vmatpush1.msra.mxu0 0.0
    %221 = vmatprep.subr.mxu0 0.0
    %222 = vmatpush1.msra.mxu0 0.0
    %223 = vmatprep.subr.mxu0 0.0
    %224 = vmatpush1.msra.mxu0 0.0
    %225 = vmatprep.subr.mxu0 0.0
    %226 = vmatpush1.msra.mxu0 0.0
    %227 = vmatprep.subr.mxu0 0.0
    %228 = vmatpush1.msra.mxu0 0.0
    %229 = vmatprep.subr.mxu0 0.0
    %230 = vmatpush1.msra.mxu0 0.0
    %231 = vmatprep.subr.mxu0 0.0
    %232 = vmatpush1.msra.mxu0 0.0
    %233 = vmatprep.subr.mxu0 0.0
    %234 = vmatpush1.msra.mxu0 0.0
    %235 = vmatprep.subr.mxu0 0.0
    %236 = vmatpush1.msra.mxu0 0.0
    %237 = vmatprep.subr.mxu0 0.0
    %238 = vmatpush1.msra.mxu0 0.0
    %239 = vmatprep.subr.mxu0 0.0
    %240 = vmatpush1.msra.mxu0 0.0
    %241 = vmatprep.subr.mxu0 0.0
    %242 = vmatpush1.msra.mxu0 0.0
    %243 = vmatprep.subr.mxu0 0.0
    %244 = vmatpush1.msra.mxu0 0.0
    %245 = vmatprep.subr.mxu0 0.0
    %246 = vmatpush1.msra.mxu0 0.0
    %247 = vmatprep.subr.mxu0 0.0
    %248 = vmatpush1.msra.mxu0 0.0
    %249 = vmatprep.subr.mxu0 0.0
    %250 = vmatpush1.msra.mxu0 0.0
    %251 = vmatprep.mubr.f32.mxu0 0.0
    %252 = vmatmul.mubr.f32.gmra.mrb[0].mxu0 %v185
    %v253 = vpop.f32.mrb[0].mxu0
    %v254 = vadd.f32 0.0, %v253
    %v255 = vpop.f32.mrb[0].mxu0
    %256 = vdwg.mxu0
    %v257 = vmul.f32 %v254, %v20
    %v258 = vadd.f32 %v183, %v257
    %v259 = vmul.f32 %v180, %v19
    %v261 = vsel %vm35, %v180, 0
    %263 = vmatprep.subr.mxu0 0.0
    %264 = vmatpush1.msra.mxu0 %v21
    %265 = vmatprep.subr.mxu0 0.0
    %266 = vmatpush1.msra.mxu0 %v22
    %267 = vmatprep.subr.mxu0 0.0
    %268 = vmatpush1.msra.mxu0 0.0
    %269 = vmatprep.subr.mxu0 0.0
    %270 = vmatpush1.msra.mxu0 0.0
    %271 = vmatprep.subr.mxu0 0.0
    %272 = vmatpush1.msra.mxu0 0.0
    %273 = vmatprep.subr.mxu0 0.0
    %274 = vmatpush1.msra.mxu0 0.0
    %275 = vmatprep.subr.mxu0 0.0
    %276 = vmatpush1.msra.mxu0 0.0
    %277 = vmatprep.subr.mxu0 0.0
    %278 = vmatpush1.msra.mxu0 0.0
    %279 = vmatprep.subr.mxu0 0.0
    %280 = vmatpush1.msra.mxu0 0.0
    %281 = vmatprep.subr.mxu0 0.0
    %282 = vmatpush1.msra.mxu0 0.0
    %283 = vmatprep.subr.mxu0 0.0
    %284 = vmatpush1.msra.mxu0 0.0
    %285 = vmatprep.subr.mxu0 0.0
    %286 = vmatpush1.msra.mxu0 0.0
    %287 = vmatprep.subr.mxu0 0.0
    %288 = vmatpush1.msra.mxu0 0.0
    %289 = vmatprep.subr.mxu0 0.0
    %290 = vmatpush1.msra.mxu0 0.0
    %291 = vmatprep.subr.mxu0 0.0
    %292 = vmatpush1.msra.mxu0 0.0
    %293 = vmatprep.subr.mxu0 0.0
    %294 = vmatpush1.msra.mxu0 0.0
    %295 = vmatprep.subr.mxu0 0.0
    %296 = vmatpush1.msra.mxu0 0.0
    %297 = vmatprep.subr.mxu0 0.0
    %298 = vmatpush1.msra.mxu0 0.0
    %299 = vmatprep.subr.mxu0 0.0
    %300 = vmatpush1.msra.mxu0 0.0
    %301 = vmatprep.subr.mxu0 0.0
    %302 = vmatpush1.msra.mxu0 0.0
    %303 = vmatprep.subr.mxu0 0.0
    %304 = vmatpush1.msra.mxu0 0.0
    %305 = vmatprep.subr.mxu0 0.0
    %306 = vmatpush1.msra.mxu0 0.0
    %307 = vmatprep.subr.mxu0 0.0
    %308 = vmatpush1.msra.mxu0 0.0
    %309 = vmatprep.subr.mxu0 0.0
    %310 = vmatpush1.msra.mxu0 0.0
    %311 = vmatprep.subr.mxu0 0.0
    %312 = vmatpush1.msra.mxu0 0.0
    %313 = vmatprep.subr.mxu0 0.0
    %314 = vmatpush1.msra.mxu0 0.0
    %315 = vmatprep.subr.mxu0 0.0
    %316 = vmatpush1.msra.mxu0 0.0
    %317 = vmatprep.subr.mxu0 0.0
    %318 = vmatpush1.msra.mxu0 0.0
    %319 = vmatprep.subr.mxu0 0.0
    %320 = vmatpush1.msra.mxu0 0.0
    %321 = vmatprep.subr.mxu0 0.0
    %322 = vmatpush1.msra.mxu0 0.0
    %323 = vmatprep.subr.mxu0 0.0
    %324 = vmatpush1.msra.mxu0 0.0
    %325 = vmatprep.subr.mxu0 0.0
    %326 = vmatpush1.msra.mxu0 0.0
    %327 = vmatprep.mubr.f32.mxu0 0.0
    %328 = vmatmul.mubr.f32.gmra.mrb[0].mxu0 %v261
    %v329 = vpop.f32.mrb[0].mxu0
    %v330 = vadd.f32 0.0, %v329
    %v331 = vpop.f32.mrb[0].mxu0
    %332 = vdwg.mxu0
    %v333 = vmul.f32 %v330, %v20
    %v334 = vadd.f32 %v259, %v333
    %v335 = vld [vmem:[%s2] sm:$0xff]
    %v336 = vld [vmem:[%s2 + $0x8] sm:$0xff]
    %v337 = vld [vmem:[%s2 + $0x10] sm:$0xff]
    %v338 = vld [vmem:[%s2 + $0x18] sm:$0xff]
    %v339 = vld [vmem:[%s2 + $0x20] sm:$0xff]
    %v340 = vld [vmem:[%s2 + $0x28] sm:$0xff]
    %v341 = vld [vmem:[%s2 + $0x30] sm:$0xff]
    %v342 = vld [vmem:[%s2 + $0x38] sm:$0xff]
    %s343 = scalar_lea.vmem %s2, 64
    %v344 = vld [vmem:[%s343] sm:$0xff]
    %v345 = vld [vmem:[%s343 + $0x8] sm:$0xff]
    %v346 = vld [vmem:[%s343 + $0x10] sm:$0xff]
    %v347 = vld [vmem:[%s343 + $0x18] sm:$0xff]
    %v348 = vld [vmem:[%s343 + $0x20] sm:$0xff]
    %v349 = vld [vmem:[%s343 + $0x28] sm:$0xff]
    %v350 = vld [vmem:[%s343 + $0x30] sm:$0xff]
    %v351 = vld [vmem:[%s343 + $0x38] sm:$0xff]
    %s352 = scalar_lea.vmem %s2, 128
    %v353 = vld [vmem:[%s352] sm:$0xff]
    %v354 = vld [vmem:[%s352 + $0x8] sm:$0xff]
    %v355 = vld [vmem:[%s352 + $0x10] sm:$0xff]
    %v356 = vld [vmem:[%s352 + $0x18] sm:$0xff]
    %v357 = vld [vmem:[%s352 + $0x20] sm:$0xff]
    %v358 = vld [vmem:[%s352 + $0x28] sm:$0xff]
    %v359 = vld [vmem:[%s352 + $0x30] sm:$0xff]
    %v360 = vld [vmem:[%s352 + $0x38] sm:$0xff]
    %s361 = scalar_lea.vmem %s2, 192
    %v362 = vld [vmem:[%s361] sm:$0xff]
    %v363 = vld [vmem:[%s361 + $0x8] sm:$0xff]
    %v364 = vld [vmem:[%s361 + $0x10] sm:$0xff]
    %v365 = vld [vmem:[%s361 + $0x18] sm:$0xff]
    %v366 = vld [vmem:[%s361 + $0x20] sm:$0xff]
    %v367 = vld [vmem:[%s361 + $0x28] sm:$0xff]
    %v368 = vld [vmem:[%s361 + $0x30] sm:$0xff]
    %v369 = vld [vmem:[%s361 + $0x38] sm:$0xff]
    %v370 = vld [vmem:[%s3] sm:$0x1]
    %v371 = vld [vmem:[%s3 + $0x1] sm:$0x1]
    %v372 = vld [vmem:[%s3 + $0x2] sm:$0x1]
    %v373 = vld [vmem:[%s3 + $0x3] sm:$0x1]
    %s374 = scalar_lea.vmem %s3, 4
    %v375 = vld [vmem:[%s374] sm:$0x1]
    %v376 = vld [vmem:[%s374 + $0x1] sm:$0x1]
    %v377 = vld [vmem:[%s374 + $0x2] sm:$0x1]
    %v378 = vld [vmem:[%s374 + $0x3] sm:$0x1]
    %s379 = scalar_lea.vmem %s3, 8
    %v380 = vld [vmem:[%s379] sm:$0x1]
    %v381 = vld [vmem:[%s379 + $0x1] sm:$0x1]
    %v382 = vld [vmem:[%s379 + $0x2] sm:$0x1]
    %v383 = vld [vmem:[%s379 + $0x3] sm:$0x1]
    %v388 = vlaneseq
    %v389 = vshrl.u32 %v388, 7
    %v390 = vsub.s32 0, %v389
    %v391 = vrot.slane %v370, %v390
    %v392 = vlaneseq
    %v393 = vshrl.u32 %v392, 7
    %v394 = vsub.s32 0, %v393
    %v395 = vrot.slane %v371, %v394
    %v396 = vlaneseq
    %v397 = vshrl.u32 %v396, 7
    %v398 = vsub.s32 0, %v397
    %v399 = vrot.slane %v372, %v398
    %v400 = vlaneseq
    %v401 = vshrl.u32 %v400, 7
    %v402 = vsub.s32 0, %v401
    %v403 = vrot.slane %v373, %v402
    %v409 = vsel %vm35, %v258, 0
    %411 = vmatprep.subr.mxu0 0.0
    %412 = vmatpush1.msra.mxu0 %v335
    %413 = vmatprep.subr.mxu0 0.0
    %414 = vmatpush1.msra.mxu0 %v336
    %415 = vmatprep.subr.mxu0 0.0
    %416 = vmatpush1.msra.mxu0 0.0
    %417 = vmatprep.subr.mxu0 0.0
    %418 = vmatpush1.msra.mxu0 0.0
    %419 = vmatprep.subr.mxu0 0.0
    %420 = vmatpush1.msra.mxu0 0.0
    %421 = vmatprep.subr.mxu0 0.0
    %422 = vmatpush1.msra.mxu0 0.0
    %423 = vmatprep.subr.mxu0 0.0
    %424 = vmatpush1.msra.mxu0 0.0
    %425 = vmatprep.subr.mxu0 0.0
    %426 = vmatpush1.msra.mxu0 0.0
    %427 = vmatprep.subr.mxu0 0.0
    %428 = vmatpush1.msra.mxu0 0.0
    %429 = vmatprep.subr.mxu0 0.0
    %430 = vmatpush1.msra.mxu0 0.0
    %431 = vmatprep.subr.mxu0 0.0
    %432 = vmatpush1.msra.mxu0 0.0
    %433 = vmatprep.subr.mxu0 0.0
    %434 = vmatpush1.msra.mxu0 0.0
    %435 = vmatprep.subr.mxu0 0.0
    %436 = vmatpush1.msra.mxu0 0.0
    %437 = vmatprep.subr.mxu0 0.0
    %438 = vmatpush1.msra.mxu0 0.0
    %439 = vmatprep.subr.mxu0 0.0
    %440 = vmatpush1.msra.mxu0 0.0
    %441 = vmatprep.subr.mxu0 0.0
    %442 = vmatpush1.msra.mxu0 0.0
    %443 = vmatprep.subr.mxu0 0.0
    %444 = vmatpush1.msra.mxu0 0.0
    %445 = vmatprep.subr.mxu0 0.0
    %446 = vmatpush1.msra.mxu0 0.0
    %447 = vmatprep.subr.mxu0 0.0
    %448 = vmatpush1.msra.mxu0 0.0
    %449 = vmatprep.subr.mxu0 0.0
    %450 = vmatpush1.msra.mxu0 0.0
    %451 = vmatprep.subr.mxu0 0.0
    %452 = vmatpush1.msra.mxu0 0.0
    %453 = vmatprep.subr.mxu0 0.0
    %454 = vmatpush1.msra.mxu0 0.0
    %455 = vmatprep.subr.mxu0 0.0
    %456 = vmatpush1.msra.mxu0 0.0
    %457 = vmatprep.subr.mxu0 0.0
    %458 = vmatpush1.msra.mxu0 0.0
    %459 = vmatprep.subr.mxu0 0.0
    %460 = vmatpush1.msra.mxu0 0.0
    %461 = vmatprep.subr.mxu0 0.0
    %462 = vmatpush1.msra.mxu0 0.0
    %463 = vmatprep.subr.mxu0 0.0
    %464 = vmatpush1.msra.mxu0 0.0
    %465 = vmatprep.subr.mxu0 0.0
    %466 = vmatpush1.msra.mxu0 0.0
    %467 = vmatprep.subr.mxu0 0.0
    %468 = vmatpush1.msra.mxu0 0.0
    %469 = vmatprep.subr.mxu0 0.0
    %470 = vmatpush1.msra.mxu0 0.0
    %471 = vmatprep.subr.mxu0 0.0
    %472 = vmatpush1.msra.mxu0 0.0
    %473 = vmatprep.subr.mxu0 0.0
    %474 = vmatpush1.msra.mxu0 0.0
    %475 = vmatprep.mubr.f32.mxu0 0.0
    %476 = vmatmul.mubr.f32.gmra.mrb[0].mxu0 %v409
    %v477 = vpop.f32.mrb[0].mxu0
    %v478 = vadd.f32 %v391, %v477
    %v479 = vpop.f32.mrb[0].mxu0
    %480 = vdwg.mxu0
    %481 = vmatprep.subr.mxu0 0.0
    %482 = vmatpush1.msra.mxu0 %v337
    %483 = vmatprep.subr.mxu0 0.0
    %484 = vmatpush1.msra.mxu0 %v338
    %485 = vmatprep.subr.mxu0 0.0
    %486 = vmatpush1.msra.mxu0 0.0
    %487 = vmatprep.subr.mxu0 0.0
    %488 = vmatpush1.msra.mxu0 0.0
    %489 = vmatprep.subr.mxu0 0.0
    %490 = vmatpush1.msra.mxu0 0.0
    %491 = vmatprep.subr.mxu0 0.0
    %492 = vmatpush1.msra.mxu0 0.0
    %493 = vmatprep.subr.mxu0 0.0
    %494 = vmatpush1.msra.mxu0 0.0
    %495 = vmatprep.subr.mxu0 0.0
    %496 = vmatpush1.msra.mxu0 0.0
    %497 = vmatprep.subr.mxu0 0.0
    %498 = vmatpush1.msra.mxu0 0.0
    %499 = vmatprep.subr.mxu0 0.0
    %500 = vmatpush1.msra.mxu0 0.0
    %501 = vmatprep.subr.mxu0 0.0
    %502 = vmatpush1.msra.mxu0 0.0
    %503 = vmatprep.subr.mxu0 0.0
    %504 = vmatpush1.msra.mxu0 0.0
    %505 = vmatprep.subr.mxu0 0.0
    %506 = vmatpush1.msra.mxu0 0.0
    %507 = vmatprep.subr.mxu0 0.0
    %508 = vmatpush1.msra.mxu0 0.0
    %509 = vmatprep.subr.mxu0 0.0
    %510 = vmatpush1.msra.mxu0 0.0
    %511 = vmatprep.subr.mxu0 0.0
    %512 = vmatpush1.msra.mxu0 0.0
    %513 = vmatprep.subr.mxu0 0.0
    %514 = vmatpush1.msra.mxu0 0.0
    %515 = vmatprep.subr.mxu0 0.0
    %516 = vmatpush1.msra.mxu0 0.0
    %517 = vmatprep.subr.mxu0 0.0
    %518 = vmatpush1.msra.mxu0 0.0
    %519 = vmatprep.subr.mxu0 0.0
    %520 = vmatpush1.msra.mxu0 0.0
    %521 = vmatprep.subr.mxu0 0.0
    %522 = vmatpush1.msra.mxu0 0.0
    %523 = vmatprep.subr.mxu0 0.0
    %524 = vmatpush1.msra.mxu0 0.0
    %525 = vmatprep.subr.mxu0 0.0
    %526 = vmatpush1.msra.mxu0 0.0
    %527 = vmatprep.subr.mxu0 0.0
    %528 = vmatpush1.msra.mxu0 0.0
    %529 = vmatprep.subr.mxu0 0.0
    %530 = vmatpush1.msra.mxu0 0.0
    %531 = vmatprep.subr.mxu0 0.0
    %532 = vmatpush1.msra.mxu0 0.0
    %533 = vmatprep.subr.mxu0 0.0
    %534 = vmatpush1.msra.mxu0 0.0
    %535 = vmatprep.subr.mxu0 0.0
    %536 = vmatpush1.msra.mxu0 0.0
    %537 = vmatprep.subr.mxu0 0.0
    %538 = vmatpush1.msra.mxu0 0.0
    %539 = vmatprep.subr.mxu0 0.0
    %540 = vmatpush1.msra.mxu0 0.0
    %541 = vmatprep.subr.mxu0 0.0
    %542 = vmatpush1.msra.mxu0 0.0
    %543 = vmatprep.subr.mxu0 0.0
    %544 = vmatpush1.msra.mxu0 0.0
    %545 = vmatprep.mubr.f32.mxu0 0.0
    %546 = vmatmul.mubr.f32.gmra.mrb[0].mxu0 %v409
    %v547 = vpop.f32.mrb[0].mxu0
    %v548 = vadd.f32 %v395, %v547
    %v549 = vpop.f32.mrb[0].mxu0
    %550 = vdwg.mxu0
    %551 = vmatprep.subr.mxu0 0.0
    %552 = vmatpush1.msra.mxu0 %v339
    %553 = vmatprep.subr.mxu0 0.0
    %554 = vmatpush1.msra.mxu0 %v340
    %555 = vmatprep.subr.mxu0 0.0
    %556 = vmatpush1.msra.mxu0 0.0
    %557 = vmatprep.subr.mxu0 0.0
    %558 = vmatpush1.msra.mxu0 0.0
    %559 = vmatprep.subr.mxu0 0.0
    %560 = vmatpush1.msra.mxu0 0.0
    %561 = vmatprep.subr.mxu0 0.0
    %562 = vmatpush1.msra.mxu0 0.0
    %563 = vmatprep.subr.mxu0 0.0
    %564 = vmatpush1.msra.mxu0 0.0
    %565 = vmatprep.subr.mxu0 0.0
    %566 = vmatpush1.msra.mxu0 0.0
    %567 = vmatprep.subr.mxu0 0.0
    %568 = vmatpush1.msra.mxu0 0.0
    %569 = vmatprep.subr.mxu0 0.0
    %570 = vmatpush1.msra.mxu0 0.0
    %571 = vmatprep.subr.mxu0 0.0
    %572 = vmatpush1.msra.mxu0 0.0
    %573 = vmatprep.subr.mxu0 0.0
    %574 = vmatpush1.msra.mxu0 0.0
    %575 = vmatprep.subr.mxu0 0.0
    %576 = vmatpush1.msra.mxu0 0.0
    %577 = vmatprep.subr.mxu0 0.0
    %578 = vmatpush1.msra.mxu0 0.0
    %579 = vmatprep.subr.mxu0 0.0
    %580 = vmatpush1.msra.mxu0 0.0
    %581 = vmatprep.subr.mxu0 0.0
    %582 = vmatpush1.msra.mxu0 0.0
    %583 = vmatprep.subr.mxu0 0.0
    %584 = vmatpush1.msra.mxu0 0.0
    %585 = vmatprep.subr.mxu0 0.0
    %586 = vmatpush1.msra.mxu0 0.0
    %587 = vmatprep.subr.mxu0 0.0
    %588 = vmatpush1.msra.mxu0 0.0
    %589 = vmatprep.subr.mxu0 0.0
    %590 = vmatpush1.msra.mxu0 0.0
    %591 = vmatprep.subr.mxu0 0.0
    %592 = vmatpush1.msra.mxu0 0.0
    %593 = vmatprep.subr.mxu0 0.0
    %594 = vmatpush1.msra.mxu0 0.0
    %595 = vmatprep.subr.mxu0 0.0
    %596 = vmatpush1.msra.mxu0 0.0
    %597 = vmatprep.subr.mxu0 0.0
    %598 = vmatpush1.msra.mxu0 0.0
    %599 = vmatprep.subr.mxu0 0.0
    %600 = vmatpush1.msra.mxu0 0.0
    %601 = vmatprep.subr.mxu0 0.0
    %602 = vmatpush1.msra.mxu0 0.0
    %603 = vmatprep.subr.mxu0 0.0
    %604 = vmatpush1.msra.mxu0 0.0
    %605 = vmatprep.subr.mxu0 0.0
    %606 = vmatpush1.msra.mxu0 0.0
    %607 = vmatprep.subr.mxu0 0.0
    %608 = vmatpush1.msra.mxu0 0.0
    %609 = vmatprep.subr.mxu0 0.0
    %610 = vmatpush1.msra.mxu0 0.0
    %611 = vmatprep.subr.mxu0 0.0
    %612 = vmatpush1.msra.mxu0 0.0
    %613 = vmatprep.subr.mxu0 0.0
    %614 = vmatpush1.msra.mxu0 0.0
    %615 = vmatprep.mubr.f32.mxu0 0.0
    %616 = vmatmul.mubr.f32.gmra.mrb[0].mxu0 %v409
    %v617 = vpop.f32.mrb[0].mxu0
    %v618 = vadd.f32 %v399, %v617
    %v619 = vpop.f32.mrb[0].mxu0
    %620 = vdwg.mxu0
    %621 = vmatprep.subr.mxu0 0.0
    %622 = vmatpush1.msra.mxu0 %v341
    %623 = vmatprep.subr.mxu0 0.0
    %624 = vmatpush1.msra.mxu0 %v342
    %625 = vmatprep.subr.mxu0 0.0
    %626 = vmatpush1.msra.mxu0 0.0
    %627 = vmatprep.subr.mxu0 0.0
    %628 = vmatpush1.msra.mxu0 0.0
    %629 = vmatprep.subr.mxu0 0.0
    %630 = vmatpush1.msra.mxu0 0.0
    %631 = vmatprep.subr.mxu0 0.0
    %632 = vmatpush1.msra.mxu0 0.0
    %633 = vmatprep.subr.mxu0 0.0
    %634 = vmatpush1.msra.mxu0 0.0
    %635 = vmatprep.subr.mxu0 0.0
    %636 = vmatpush1.msra.mxu0 0.0
    %637 = vmatprep.subr.mxu0 0.0
    %638 = vmatpush1.msra.mxu0 0.0
    %639 = vmatprep.subr.mxu0 0.0
    %640 = vmatpush1.msra.mxu0 0.0
    %641 = vmatprep.subr.mxu0 0.0
    %642 = vmatpush1.msra.mxu0 0.0
    %643 = vmatprep.subr.mxu0 0.0
    %644 = vmatpush1.msra.mxu0 0.0
    %645 = vmatprep.subr.mxu0 0.0
    %646 = vmatpush1.msra.mxu0 0.0
    %647 = vmatprep.subr.mxu0 0.0
    %648 = vmatpush1.msra.mxu0 0.0
    %649 = vmatprep.subr.mxu0 0.0
    %650 = vmatpush1.msra.mxu0 0.0
    %651 = vmatprep.subr.mxu0 0.0
    %652 = vmatpush1.msra.mxu0 0.0
    %653 = vmatprep.subr.mxu0 0.0
    %654 = vmatpush1.msra.mxu0 0.0
    %655 = vmatprep.subr.mxu0 0.0
    %656 = vmatpush1.msra.mxu0 0.0
    %657 = vmatprep.subr.mxu0 0.0
    %658 = vmatpush1.msra.mxu0 0.0
    %659 = vmatprep.subr.mxu0 0.0
    %660 = vmatpush1.msra.mxu0 0.0
    %661 = vmatprep.subr.mxu0 0.0
    %662 = vmatpush1.msra.mxu0 0.0
    %663 = vmatprep.subr.mxu0 0.0
    %664 = vmatpush1.msra.mxu0 0.0
    %665 = vmatprep.subr.mxu0 0.0
    %666 = vmatpush1.msra.mxu0 0.0
    %667 = vmatprep.subr.mxu0 0.0
    %668 = vmatpush1.msra.mxu0 0.0
    %669 = vmatprep.subr.mxu0 0.0
    %670 = vmatpush1.msra.mxu0 0.0
    %671 = vmatprep.subr.mxu0 0.0
    %672 = vmatpush1.msra.mxu0 0.0
    %673 = vmatprep.subr.mxu0 0.0
    %674 = vmatpush1.msra.mxu0 0.0
    %675 = vmatprep.subr.mxu0 0.0
    %676 = vmatpush1.msra.mxu0 0.0
    %677 = vmatprep.subr.mxu0 0.0
    %678 = vmatpush1.msra.mxu0 0.0
    %679 = vmatprep.subr.mxu0 0.0
    %680 = vmatpush1.msra.mxu0 0.0
    %681 = vmatprep.subr.mxu0 0.0
    %682 = vmatpush1.msra.mxu0 0.0
    %683 = vmatprep.subr.mxu0 0.0
    %684 = vmatpush1.msra.mxu0 0.0
    %685 = vmatprep.mubr.f32.mxu0 0.0
    %686 = vmatmul.mubr.f32.gmra.mrb[0].mxu0 %v409
    %v687 = vpop.f32.mrb[0].mxu0
    %v688 = vadd.f32 %v403, %v687
    %v689 = vpop.f32.mrb[0].mxu0
    %690 = vdwg.mxu0
    %v695 = vlaneseq
    %v696 = vshrl.u32 %v695, 7
    %v697 = vsub.s32 0, %v696
    %v698 = vrot.slane %v375, %v697
    %v699 = vlaneseq
    %v700 = vshrl.u32 %v699, 7
    %v701 = vsub.s32 0, %v700
    %v702 = vrot.slane %v376, %v701
    %v703 = vlaneseq
    %v704 = vshrl.u32 %v703, 7
    %v705 = vsub.s32 0, %v704
    %v706 = vrot.slane %v377, %v705
    %v707 = vlaneseq
    %v708 = vshrl.u32 %v707, 7
    %v709 = vsub.s32 0, %v708
    %v710 = vrot.slane %v378, %v709
    %v716 = vsel %vm35, %v334, 0
    %718 = vmatprep.subr.mxu0 0.0
    %719 = vmatpush1.msra.mxu0 %v344
    %720 = vmatprep.subr.mxu0 0.0
    %721 = vmatpush1.msra.mxu0 %v345
    %722 = vmatprep.subr.mxu0 0.0
    %723 = vmatpush1.msra.mxu0 0.0
    %724 = vmatprep.subr.mxu0 0.0
    %725 = vmatpush1.msra.mxu0 0.0
    %726 = vmatprep.subr.mxu0 0.0
    %727 = vmatpush1.msra.mxu0 0.0
    %728 = vmatprep.subr.mxu0 0.0
    %729 = vmatpush1.msra.mxu0 0.0
    %730 = vmatprep.subr.mxu0 0.0
    %731 = vmatpush1.msra.mxu0 0.0
    %732 = vmatprep.subr.mxu0 0.0
    %733 = vmatpush1.msra.mxu0 0.0
    %734 = vmatprep.subr.mxu0 0.0
    %735 = vmatpush1.msra.mxu0 0.0
    %736 = vmatprep.subr.mxu0 0.0
    %737 = vmatpush1.msra.mxu0 0.0
    %738 = vmatprep.subr.mxu0 0.0
    %739 = vmatpush1.msra.mxu0 0.0
    %740 = vmatprep.subr.mxu0 0.0
    %741 = vmatpush1.msra.mxu0 0.0
    %742 = vmatprep.subr.mxu0 0.0
    %743 = vmatpush1.msra.mxu0 0.0
    %744 = vmatprep.subr.mxu0 0.0
    %745 = vmatpush1.msra.mxu0 0.0
    %746 = vmatprep.subr.mxu0 0.0
    %747 = vmatpush1.msra.mxu0 0.0
    %748 = vmatprep.subr.mxu0 0.0
    %749 = vmatpush1.msra.mxu0 0.0
    %750 = vmatprep.subr.mxu0 0.0
    %751 = vmatpush1.msra.mxu0 0.0
    %752 = vmatprep.subr.mxu0 0.0
    %753 = vmatpush1.msra.mxu0 0.0
    %754 = vmatprep.subr.mxu0 0.0
    %755 = vmatpush1.msra.mxu0 0.0
    %756 = vmatprep.subr.mxu0 0.0
    %757 = vmatpush1.msra.mxu0 0.0
    %758 = vmatprep.subr.mxu0 0.0
    %759 = vmatpush1.msra.mxu0 0.0
    %760 = vmatprep.subr.mxu0 0.0
    %761 = vmatpush1.msra.mxu0 0.0
    %762 = vmatprep.subr.mxu0 0.0
    %763 = vmatpush1.msra.mxu0 0.0
    %764 = vmatprep.subr.mxu0 0.0
    %765 = vmatpush1.msra.mxu0 0.0
    %766 = vmatprep.subr.mxu0 0.0
    %767 = vmatpush1.msra.mxu0 0.0
    %768 = vmatprep.subr.mxu0 0.0
    %769 = vmatpush1.msra.mxu0 0.0
    %770 = vmatprep.subr.mxu0 0.0
    %771 = vmatpush1.msra.mxu0 0.0
    %772 = vmatprep.subr.mxu0 0.0
    %773 = vmatpush1.msra.mxu0 0.0
    %774 = vmatprep.subr.mxu0 0.0
    %775 = vmatpush1.msra.mxu0 0.0
    %776 = vmatprep.subr.mxu0 0.0
    %777 = vmatpush1.msra.mxu0 0.0
    %778 = vmatprep.subr.mxu0 0.0
    %779 = vmatpush1.msra.mxu0 0.0
    %780 = vmatprep.subr.mxu0 0.0
    %781 = vmatpush1.msra.mxu0 0.0
    %782 = vmatprep.mubr.f32.mxu0 0.0
    %783 = vmatmul.mubr.f32.gmra.mrb[0].mxu0 %v716
    %v784 = vpop.f32.mrb[0].mxu0
    %v785 = vadd.f32 %v698, %v784
    %v786 = vpop.f32.mrb[0].mxu0
    %787 = vdwg.mxu0
    %788 = vmatprep.subr.mxu0 0.0
    %789 = vmatpush1.msra.mxu0 %v346
    %790 = vmatprep.subr.mxu0 0.0
    %791 = vmatpush1.msra.mxu0 %v347
    %792 = vmatprep.subr.mxu0 0.0
    %793 = vmatpush1.msra.mxu0 0.0
    %794 = vmatprep.subr.mxu0 0.0
    %795 = vmatpush1.msra.mxu0 0.0
    %796 = vmatprep.subr.mxu0 0.0
    %797 = vmatpush1.msra.mxu0 0.0
    %798 = vmatprep.subr.mxu0 0.0
    %799 = vmatpush1.msra.mxu0 0.0
    %800 = vmatprep.subr.mxu0 0.0
    %801 = vmatpush1.msra.mxu0 0.0
    %802 = vmatprep.subr.mxu0 0.0
    %803 = vmatpush1.msra.mxu0 0.0
    %804 = vmatprep.subr.mxu0 0.0
    %805 = vmatpush1.msra.mxu0 0.0
    %806 = vmatprep.subr.mxu0 0.0
    %807 = vmatpush1.msra.mxu0 0.0
    %808 = vmatprep.subr.mxu0 0.0
    %809 = vmatpush1.msra.mxu0 0.0
    %810 = vmatprep.subr.mxu0 0.0
    %811 = vmatpush1.msra.mxu0 0.0
    %812 = vmatprep.subr.mxu0 0.0
    %813 = vmatpush1.msra.mxu0 0.0
    %814 = vmatprep.subr.mxu0 0.0
    %815 = vmatpush1.msra.mxu0 0.0
    %816 = vmatprep.subr.mxu0 0.0
    %817 = vmatpush1.msra.mxu0 0.0
    %818 = vmatprep.subr.mxu0 0.0
    %819 = vmatpush1.msra.mxu0 0.0
    %820 = vmatprep.subr.mxu0 0.0
    %821 = vmatpush1.msra.mxu0 0.0
    %822 = vmatprep.subr.mxu0 0.0
    %823 = vmatpush1.msra.mxu0 0.0
    %824 = vmatprep.subr.mxu0 0.0
    %825 = vmatpush1.msra.mxu0 0.0
    %826 = vmatprep.subr.mxu0 0.0
    %827 = vmatpush1.msra.mxu0 0.0
    %828 = vmatprep.subr.mxu0 0.0
    %829 = vmatpush1.msra.mxu0 0.0
    %830 = vmatprep.subr.mxu0 0.0
    %831 = vmatpush1.msra.mxu0 0.0
    %832 = vmatprep.subr.mxu0 0.0
    %833 = vmatpush1.msra.mxu0 0.0
    %834 = vmatprep.subr.mxu0 0.0
    %835 = vmatpush1.msra.mxu0 0.0
    %836 = vmatprep.subr.mxu0 0.0
    %837 = vmatpush1.msra.mxu0 0.0
    %838 = vmatprep.subr.mxu0 0.0
    %839 = vmatpush1.msra.mxu0 0.0
    %840 = vmatprep.subr.mxu0 0.0
    %841 = vmatpush1.msra.mxu0 0.0
    %842 = vmatprep.subr.mxu0 0.0
    %843 = vmatpush1.msra.mxu0 0.0
    %844 = vmatprep.subr.mxu0 0.0
    %845 = vmatpush1.msra.mxu0 0.0
    %846 = vmatprep.subr.mxu0 0.0
    %847 = vmatpush1.msra.mxu0 0.0
    %848 = vmatprep.subr.mxu0 0.0
    %849 = vmatpush1.msra.mxu0 0.0
    %850 = vmatprep.subr.mxu0 0.0
    %851 = vmatpush1.msra.mxu0 0.0
    %852 = vmatprep.mubr.f32.mxu0 0.0
    %853 = vmatmul.mubr.f32.gmra.mrb[0].mxu0 %v716
    %v854 = vpop.f32.mrb[0].mxu0
    %v855 = vadd.f32 %v702, %v854
    %v856 = vpop.f32.mrb[0].mxu0
    %857 = vdwg.mxu0
    %858 = vmatprep.subr.mxu0 0.0
    %859 = vmatpush1.msra.mxu0 %v348
    %860 = vmatprep.subr.mxu0 0.0
    %861 = vmatpush1.msra.mxu0 %v349
    %862 = vmatprep.subr.mxu0 0.0
    %863 = vmatpush1.msra.mxu0 0.0
    %864 = vmatprep.subr.mxu0 0.0
    %865 = vmatpush1.msra.mxu0 0.0
    %866 = vmatprep.subr.mxu0 0.0
    %867 = vmatpush1.msra.mxu0 0.0
    %868 = vmatprep.subr.mxu0 0.0
    %869 = vmatpush1.msra.mxu0 0.0
    %870 = vmatprep.subr.mxu0 0.0
    %871 = vmatpush1.msra.mxu0 0.0
    %872 = vmatprep.subr.mxu0 0.0
    %873 = vmatpush1.msra.mxu0 0.0
    %874 = vmatprep.subr.mxu0 0.0
    %875 = vmatpush1.msra.mxu0 0.0
    %876 = vmatprep.subr.mxu0 0.0
    %877 = vmatpush1.msra.mxu0 0.0
    %878 = vmatprep.subr.mxu0 0.0
    %879 = vmatpush1.msra.mxu0 0.0
    %880 = vmatprep.subr.mxu0 0.0
    %881 = vmatpush1.msra.mxu0 0.0
    %882 = vmatprep.subr.mxu0 0.0
    %883 = vmatpush1.msra.mxu0 0.0
    %884 = vmatprep.subr.mxu0 0.0
    %885 = vmatpush1.msra.mxu0 0.0
    %886 = vmatprep.subr.mxu0 0.0
    %887 = vmatpush1.msra.mxu0 0.0
    %888 = vmatprep.subr.mxu0 0.0
    %889 = vmatpush1.msra.mxu0 0.0
    %890 = vmatprep.subr.mxu0 0.0
    %891 = vmatpush1.msra.mxu0 0.0
    %892 = vmatprep.subr.mxu0 0.0
    %893 = vmatpush1.msra.mxu0 0.0
    %894 = vmatprep.subr.mxu0 0.0
    %895 = vmatpush1.msra.mxu0 0.0
    %896 = vmatprep.subr.mxu0 0.0
    %897 = vmatpush1.msra.mxu0 0.0
    %898 = vmatprep.subr.mxu0 0.0
    %899 = vmatpush1.msra.mxu0 0.0
    %900 = vmatprep.subr.mxu0 0.0
    %901 = vmatpush1.msra.mxu0 0.0
    %902 = vmatprep.subr.mxu0 0.0
    %903 = vmatpush1.msra.mxu0 0.0
    %904 = vmatprep.subr.mxu0 0.0
    %905 = vmatpush1.msra.mxu0 0.0
    %906 = vmatprep.subr.mxu0 0.0
    %907 = vmatpush1.msra.mxu0 0.0
    %908 = vmatprep.subr.mxu0 0.0
    %909 = vmatpush1.msra.mxu0 0.0
    %910 = vmatprep.subr.mxu0 0.0
    %911 = vmatpush1.msra.mxu0 0.0
    %912 = vmatprep.subr.mxu0 0.0
    %913 = vmatpush1.msra.mxu0 0.0
    %914 = vmatprep.subr.mxu0 0.0
    %915 = vmatpush1.msra.mxu0 0.0
    %916 = vmatprep.subr.mxu0 0.0
    %917 = vmatpush1.msra.mxu0 0.0
    %918 = vmatprep.subr.mxu0 0.0
    %919 = vmatpush1.msra.mxu0 0.0
    %920 = vmatprep.subr.mxu0 0.0
    %921 = vmatpush1.msra.mxu0 0.0
    %922 = vmatprep.mubr.f32.mxu0 0.0
    %923 = vmatmul.mubr.f32.gmra.mrb[0].mxu0 %v716
    %v924 = vpop.f32.mrb[0].mxu0
    %v925 = vadd.f32 %v706, %v924
    %v926 = vpop.f32.mrb[0].mxu0
    %927 = vdwg.mxu0
    %928 = vmatprep.subr.mxu0 0.0
    %929 = vmatpush1.msra.mxu0 %v350
    %930 = vmatprep.subr.mxu0 0.0
    %931 = vmatpush1.msra.mxu0 %v351
    %932 = vmatprep.subr.mxu0 0.0
    %933 = vmatpush1.msra.mxu0 0.0
    %934 = vmatprep.subr.mxu0 0.0
    %935 = vmatpush1.msra.mxu0 0.0
    %936 = vmatprep.subr.mxu0 0.0
    %937 = vmatpush1.msra.mxu0 0.0
    %938 = vmatprep.subr.mxu0 0.0
    %939 = vmatpush1.msra.mxu0 0.0
    %940 = vmatprep.subr.mxu0 0.0
    %941 = vmatpush1.msra.mxu0 0.0
    %942 = vmatprep.subr.mxu0 0.0
    %943 = vmatpush1.msra.mxu0 0.0
    %944 = vmatprep.subr.mxu0 0.0
    %945 = vmatpush1.msra.mxu0 0.0
    %946 = vmatprep.subr.mxu0 0.0
    %947 = vmatpush1.msra.mxu0 0.0
    %948 = vmatprep.subr.mxu0 0.0
    %949 = vmatpush1.msra.mxu0 0.0
    %950 = vmatprep.subr.mxu0 0.0
    %951 = vmatpush1.msra.mxu0 0.0
    %952 = vmatprep.subr.mxu0 0.0
    %953 = vmatpush1.msra.mxu0 0.0
    %954 = vmatprep.subr.mxu0 0.0
    %955 = vmatpush1.msra.mxu0 0.0
    %956 = vmatprep.subr.mxu0 0.0
    %957 = vmatpush1.msra.mxu0 0.0
    %958 = vmatprep.subr.mxu0 0.0
    %959 = vmatpush1.msra.mxu0 0.0
    %960 = vmatprep.subr.mxu0 0.0
    %961 = vmatpush1.msra.mxu0 0.0
    %962 = vmatprep.subr.mxu0 0.0
    %963 = vmatpush1.msra.mxu0 0.0
    %964 = vmatprep.subr.mxu0 0.0
    %965 = vmatpush1.msra.mxu0 0.0
    %966 = vmatprep.subr.mxu0 0.0
    %967 = vmatpush1.msra.mxu0 0.0
    %968 = vmatprep.subr.mxu0 0.0
    %969 = vmatpush1.msra.mxu0 0.0
    %970 = vmatprep.subr.mxu0 0.0
    %971 = vmatpush1.msra.mxu0 0.0
    %972 = vmatprep.subr.mxu0 0.0
    %973 = vmatpush1.msra.mxu0 0.0
    %974 = vmatprep.subr.mxu0 0.0
    %975 = vmatpush1.msra.mxu0 0.0
    %976 = vmatprep.subr.mxu0 0.0
    %977 = vmatpush1.msra.mxu0 0.0
    %978 = vmatprep.subr.mxu0 0.0
    %979 = vmatpush1.msra.mxu0 0.0
    %980 = vmatprep.subr.mxu0 0.0
    %981 = vmatpush1.msra.mxu0 0.0
    %982 = vmatprep.subr.mxu0 0.0
    %983 = vmatpush1.msra.mxu0 0.0
    %984 = vmatprep.subr.mxu0 0.0
    %985 = vmatpush1.msra.mxu0 0.0
    %986 = vmatprep.subr.mxu0 0.0
    %987 = vmatpush1.msra.mxu0 0.0
    %988 = vmatprep.subr.mxu0 0.0
    %989 = vmatpush1.msra.mxu0 0.0
    %990 = vmatprep.subr.mxu0 0.0
    %991 = vmatpush1.msra.mxu0 0.0
    %992 = vmatprep.mubr.f32.mxu0 0.0
    %993 = vmatmul.mubr.f32.gmra.mrb[0].mxu0 %v716
    %v994 = vpop.f32.mrb[0].mxu0
    %v995 = vadd.f32 %v710, %v994
    %v996 = vpop.f32.mrb[0].mxu0
    %997 = vdwg.mxu0
    %v1002 = vlaneseq
    %v1003 = vshrl.u32 %v1002, 7
    %v1004 = vsub.s32 0, %v1003
    %v1005 = vrot.slane %v380, %v1004
    %v1006 = vlaneseq
    %v1007 = vshrl.u32 %v1006, 7
    %v1008 = vsub.s32 0, %v1007
    %v1009 = vrot.slane %v381, %v1008
    %v1010 = vlaneseq
    %v1011 = vshrl.u32 %v1010, 7
    %v1012 = vsub.s32 0, %v1011
    %v1013 = vrot.slane %v382, %v1012
    %v1014 = vlaneseq
    %v1015 = vshrl.u32 %v1014, 7
    %v1016 = vsub.s32 0, %v1015
    %v1017 = vrot.slane %v383, %v1016
    %1022 = vmatprep.subr.mxu0 0.0
    %1023 = vmatpush1.msra.mxu0 %v353
    %1024 = vmatprep.subr.mxu0 0.0
    %1025 = vmatpush1.msra.mxu0 %v354
    %1026 = vmatprep.subr.mxu0 0.0
    %1027 = vmatpush1.msra.mxu0 0.0
    %1028 = vmatprep.subr.mxu0 0.0
    %1029 = vmatpush1.msra.mxu0 0.0
    %1030 = vmatprep.subr.mxu0 0.0
    %1031 = vmatpush1.msra.mxu0 0.0
    %1032 = vmatprep.subr.mxu0 0.0
    %1033 = vmatpush1.msra.mxu0 0.0
    %1034 = vmatprep.subr.mxu0 0.0
    %1035 = vmatpush1.msra.mxu0 0.0
    %1036 = vmatprep.subr.mxu0 0.0
    %1037 = vmatpush1.msra.mxu0 0.0
    %1038 = vmatprep.subr.mxu0 0.0
    %1039 = vmatpush1.msra.mxu0 0.0
    %1040 = vmatprep.subr.mxu0 0.0
    %1041 = vmatpush1.msra.mxu0 0.0
    %1042 = vmatprep.subr.mxu0 0.0
    %1043 = vmatpush1.msra.mxu0 0.0
    %1044 = vmatprep.subr.mxu0 0.0
    %1045 = vmatpush1.msra.mxu0 0.0
    %1046 = vmatprep.subr.mxu0 0.0
    %1047 = vmatpush1.msra.mxu0 0.0
    %1048 = vmatprep.subr.mxu0 0.0
    %1049 = vmatpush1.msra.mxu0 0.0
    %1050 = vmatprep.subr.mxu0 0.0
    %1051 = vmatpush1.msra.mxu0 0.0
    %1052 = vmatprep.subr.mxu0 0.0
    %1053 = vmatpush1.msra.mxu0 0.0
    %1054 = vmatprep.subr.mxu0 0.0
    %1055 = vmatpush1.msra.mxu0 0.0
    %1056 = vmatprep.subr.mxu0 0.0
    %1057 = vmatpush1.msra.mxu0 0.0
    %1058 = vmatprep.subr.mxu0 0.0
    %1059 = vmatpush1.msra.mxu0 0.0
    %1060 = vmatprep.subr.mxu0 0.0
    %1061 = vmatpush1.msra.mxu0 0.0
    %1062 = vmatprep.subr.mxu0 0.0
    %1063 = vmatpush1.msra.mxu0 0.0
    %1064 = vmatprep.subr.mxu0 0.0
    %1065 = vmatpush1.msra.mxu0 0.0
    %1066 = vmatprep.subr.mxu0 0.0
    %1067 = vmatpush1.msra.mxu0 0.0
    %1068 = vmatprep.subr.mxu0 0.0
    %1069 = vmatpush1.msra.mxu0 0.0
    %1070 = vmatprep.subr.mxu0 0.0
    %1071 = vmatpush1.msra.mxu0 0.0
    %1072 = vmatprep.subr.mxu0 0.0
    %1073 = vmatpush1.msra.mxu0 0.0
    %1074 = vmatprep.subr.mxu0 0.0
    %1075 = vmatpush1.msra.mxu0 0.0
    %1076 = vmatprep.subr.mxu0 0.0
    %1077 = vmatpush1.msra.mxu0 0.0
    %1078 = vmatprep.subr.mxu0 0.0
    %1079 = vmatpush1.msra.mxu0 0.0
    %1080 = vmatprep.subr.mxu0 0.0
    %1081 = vmatpush1.msra.mxu0 0.0
    %1082 = vmatprep.subr.mxu0 0.0
    %1083 = vmatpush1.msra.mxu0 0.0
    %1084 = vmatprep.subr.mxu0 0.0
    %1085 = vmatpush1.msra.mxu0 0.0
    %1086 = vmatprep.mubr.f32.mxu0 0.0
    %1087 = vmatmul.mubr.f32.gmra.mrb[0].mxu0 %v37
    %v1088 = vpop.f32.mrb[0].mxu0
    %v1089 = vadd.f32 %v1005, %v1088
    %v1090 = vpop.f32.mrb[0].mxu0
    %1091 = vdwg.mxu0
    %1092 = vmatprep.subr.mxu0 0.0
    %1093 = vmatpush1.msra.mxu0 %v355
    %1094 = vmatprep.subr.mxu0 0.0
    %1095 = vmatpush1.msra.mxu0 %v356
    %1096 = vmatprep.subr.mxu0 0.0
    %1097 = vmatpush1.msra.mxu0 0.0
    %1098 = vmatprep.subr.mxu0 0.0
    %1099 = vmatpush1.msra.mxu0 0.0
    %1100 = vmatprep.subr.mxu0 0.0
    %1101 = vmatpush1.msra.mxu0 0.0
    %1102 = vmatprep.subr.mxu0 0.0
    %1103 = vmatpush1.msra.mxu0 0.0
    %1104 = vmatprep.subr.mxu0 0.0
    %1105 = vmatpush1.msra.mxu0 0.0
    %1106 = vmatprep.subr.mxu0 0.0
    %1107 = vmatpush1.msra.mxu0 0.0
    %1108 = vmatprep.subr.mxu0 0.0
    %1109 = vmatpush1.msra.mxu0 0.0
    %1110 = vmatprep.subr.mxu0 0.0
    %1111 = vmatpush1.msra.mxu0 0.0
    %1112 = vmatprep.subr.mxu0 0.0
    %1113 = vmatpush1.msra.mxu0 0.0
    %1114 = vmatprep.subr.mxu0 0.0
    %1115 = vmatpush1.msra.mxu0 0.0
    %1116 = vmatprep.subr.mxu0 0.0
    %1117 = vmatpush1.msra.mxu0 0.0
    %1118 = vmatprep.subr.mxu0 0.0
    %1119 = vmatpush1.msra.mxu0 0.0
    %1120 = vmatprep.subr.mxu0 0.0
    %1121 = vmatpush1.msra.mxu0 0.0
    %1122 = vmatprep.subr.mxu0 0.0
    %1123 = vmatpush1.msra.mxu0 0.0
    %1124 = vmatprep.subr.mxu0 0.0
    %1125 = vmatpush1.msra.mxu0 0.0
    %1126 = vmatprep.subr.mxu0 0.0
    %1127 = vmatpush1.msra.mxu0 0.0
    %1128 = vmatprep.subr.mxu0 0.0
    %1129 = vmatpush1.msra.mxu0 0.0
    %1130 = vmatprep.subr.mxu0 0.0
    %1131 = vmatpush1.msra.mxu0 0.0
    %1132 = vmatprep.subr.mxu0 0.0
    %1133 = vmatpush1.msra.mxu0 0.0
    %1134 = vmatprep.subr.mxu0 0.0
    %1135 = vmatpush1.msra.mxu0 0.0
    %1136 = vmatprep.subr.mxu0 0.0
    %1137 = vmatpush1.msra.mxu0 0.0
    %1138 = vmatprep.subr.mxu0 0.0
    %1139 = vmatpush1.msra.mxu0 0.0
    %1140 = vmatprep.subr.mxu0 0.0
    %1141 = vmatpush1.msra.mxu0 0.0
    %1142 = vmatprep.subr.mxu0 0.0
    %1143 = vmatpush1.msra.mxu0 0.0
    %1144 = vmatprep.subr.mxu0 0.0
    %1145 = vmatpush1.msra.mxu0 0.0
    %1146 = vmatprep.subr.mxu0 0.0
    %1147 = vmatpush1.msra.mxu0 0.0
    %1148 = vmatprep.subr.mxu0 0.0
    %1149 = vmatpush1.msra.mxu0 0.0
    %1150 = vmatprep.subr.mxu0 0.0
    %1151 = vmatpush1.msra.mxu0 0.0
    %1152 = vmatprep.subr.mxu0 0.0
    %1153 = vmatpush1.msra.mxu0 0.0
    %1154 = vmatprep.subr.mxu0 0.0
    %1155 = vmatpush1.msra.mxu0 0.0
    %1156 = vmatprep.mubr.f32.mxu0 0.0
    %1157 = vmatmul.mubr.f32.gmra.mrb[0].mxu0 %v37
    %v1158 = vpop.f32.mrb[0].mxu0
    %v1159 = vadd.f32 %v1009, %v1158
    %v1160 = vpop.f32.mrb[0].mxu0
    %1161 = vdwg.mxu0
    %1162 = vmatprep.subr.mxu0 0.0
    %1163 = vmatpush1.msra.mxu0 %v357
    %1164 = vmatprep.subr.mxu0 0.0
    %1165 = vmatpush1.msra.mxu0 %v358
    %1166 = vmatprep.subr.mxu0 0.0
    %1167 = vmatpush1.msra.mxu0 0.0
    %1168 = vmatprep.subr.mxu0 0.0
    %1169 = vmatpush1.msra.mxu0 0.0
    %1170 = vmatprep.subr.mxu0 0.0
    %1171 = vmatpush1.msra.mxu0 0.0
    %1172 = vmatprep.subr.mxu0 0.0
    %1173 = vmatpush1.msra.mxu0 0.0
    %1174 = vmatprep.subr.mxu0 0.0
    %1175 = vmatpush1.msra.mxu0 0.0
    %1176 = vmatprep.subr.mxu0 0.0
    %1177 = vmatpush1.msra.mxu0 0.0
    %1178 = vmatprep.subr.mxu0 0.0
    %1179 = vmatpush1.msra.mxu0 0.0
    %1180 = vmatprep.subr.mxu0 0.0
    %1181 = vmatpush1.msra.mxu0 0.0
    %1182 = vmatprep.subr.mxu0 0.0
    %1183 = vmatpush1.msra.mxu0 0.0
    %1184 = vmatprep.subr.mxu0 0.0
    %1185 = vmatpush1.msra.mxu0 0.0
    %1186 = vmatprep.subr.mxu0 0.0
    %1187 = vmatpush1.msra.mxu0 0.0
    %1188 = vmatprep.subr.mxu0 0.0
    %1189 = vmatpush1.msra.mxu0 0.0
    %1190 = vmatprep.subr.mxu0 0.0
    %1191 = vmatpush1.msra.mxu0 0.0
    %1192 = vmatprep.subr.mxu0 0.0
    %1193 = vmatpush1.msra.mxu0 0.0
    %1194 = vmatprep.subr.mxu0 0.0
    %1195 = vmatpush1.msra.mxu0 0.0
    %1196 = vmatprep.subr.mxu0 0.0
    %1197 = vmatpush1.msra.mxu0 0.0
    %1198 = vmatprep.subr.mxu0 0.0
    %1199 = vmatpush1.msra.mxu0 0.0
    %1200 = vmatprep.subr.mxu0 0.0
    %1201 = vmatpush1.msra.mxu0 0.0
    %1202 = vmatprep.subr.mxu0 0.0
    %1203 = vmatpush1.msra.mxu0 0.0
    %1204 = vmatprep.subr.mxu0 0.0
    %1205 = vmatpush1.msra.mxu0 0.0
    %1206 = vmatprep.subr.mxu0 0.0
    %1207 = vmatpush1.msra.mxu0 0.0
    %1208 = vmatprep.subr.mxu0 0.0
    %1209 = vmatpush1.msra.mxu0 0.0
    %1210 = vmatprep.subr.mxu0 0.0
    %1211 = vmatpush1.msra.mxu0 0.0
    %1212 = vmatprep.subr.mxu0 0.0
    %1213 = vmatpush1.msra.mxu0 0.0
    %1214 = vmatprep.subr.mxu0 0.0
    %1215 = vmatpush1.msra.mxu0 0.0
    %1216 = vmatprep.subr.mxu0 0.0
    %1217 = vmatpush1.msra.mxu0 0.0
    %1218 = vmatprep.subr.mxu0 0.0
    %1219 = vmatpush1.msra.mxu0 0.0
    %1220 = vmatprep.subr.mxu0 0.0
    %1221 = vmatpush1.msra.mxu0 0.0
    %1222 = vmatprep.subr.mxu0 0.0
    %1223 = vmatpush1.msra.mxu0 0.0
    %1224 = vmatprep.subr.mxu0 0.0
    %1225 = vmatpush1.msra.mxu0 0.0
    %1226 = vmatprep.mubr.f32.mxu0 0.0
    %1227 = vmatmul.mubr.f32.gmra.mrb[0].mxu0 %v37
    %v1228 = vpop.f32.mrb[0].mxu0
    %v1229 = vadd.f32 %v1013, %v1228
    %v1230 = vpop.f32.mrb[0].mxu0
    %1231 = vdwg.mxu0
    %1232 = vmatprep.subr.mxu0 0.0
    %1233 = vmatpush1.msra.mxu0 %v359
    %1234 = vmatprep.subr.mxu0 0.0
    %1235 = vmatpush1.msra.mxu0 %v360
    %1236 = vmatprep.subr.mxu0 0.0
    %1237 = vmatpush1.msra.mxu0 0.0
    %1238 = vmatprep.subr.mxu0 0.0
    %1239 = vmatpush1.msra.mxu0 0.0
    %1240 = vmatprep.subr.mxu0 0.0
    %1241 = vmatpush1.msra.mxu0 0.0
    %1242 = vmatprep.subr.mxu0 0.0
    %1243 = vmatpush1.msra.mxu0 0.0
    %1244 = vmatprep.subr.mxu0 0.0
    %1245 = vmatpush1.msra.mxu0 0.0
    %1246 = vmatprep.subr.mxu0 0.0
    %1247 = vmatpush1.msra.mxu0 0.0
    %1248 = vmatprep.subr.mxu0 0.0
    %1249 = vmatpush1.msra.mxu0 0.0
    %1250 = vmatprep.subr.mxu0 0.0
    %1251 = vmatpush1.msra.mxu0 0.0
    %1252 = vmatprep.subr.mxu0 0.0
    %1253 = vmatpush1.msra.mxu0 0.0
    %1254 = vmatprep.subr.mxu0 0.0
    %1255 = vmatpush1.msra.mxu0 0.0
    %1256 = vmatprep.subr.mxu0 0.0
    %1257 = vmatpush1.msra.mxu0 0.0
    %1258 = vmatprep.subr.mxu0 0.0
    %1259 = vmatpush1.msra.mxu0 0.0
    %1260 = vmatprep.subr.mxu0 0.0
    %1261 = vmatpush1.msra.mxu0 0.0
    %1262 = vmatprep.subr.mxu0 0.0
    %1263 = vmatpush1.msra.mxu0 0.0
    %1264 = vmatprep.subr.mxu0 0.0
    %1265 = vmatpush1.msra.mxu0 0.0
    %1266 = vmatprep.subr.mxu0 0.0
    %1267 = vmatpush1.msra.mxu0 0.0
    %1268 = vmatprep.subr.mxu0 0.0
    %1269 = vmatpush1.msra.mxu0 0.0
    %1270 = vmatprep.subr.mxu0 0.0
    %1271 = vmatpush1.msra.mxu0 0.0
    %1272 = vmatprep.subr.mxu0 0.0
    %1273 = vmatpush1.msra.mxu0 0.0
    %1274 = vmatprep.subr.mxu0 0.0
    %1275 = vmatpush1.msra.mxu0 0.0
    %1276 = vmatprep.subr.mxu0 0.0
    %1277 = vmatpush1.msra.mxu0 0.0
    %1278 = vmatprep.subr.mxu0 0.0
    %1279 = vmatpush1.msra.mxu0 0.0
    %1280 = vmatprep.subr.mxu0 0.0
    %1281 = vmatpush1.msra.mxu0 0.0
    %1282 = vmatprep.subr.mxu0 0.0
    %1283 = vmatpush1.msra.mxu0 0.0
    %1284 = vmatprep.subr.mxu0 0.0
    %1285 = vmatpush1.msra.mxu0 0.0
    %1286 = vmatprep.subr.mxu0 0.0
    %1287 = vmatpush1.msra.mxu0 0.0
    %1288 = vmatprep.subr.mxu0 0.0
    %1289 = vmatpush1.msra.mxu0 0.0
    %1290 = vmatprep.subr.mxu0 0.0
    %1291 = vmatpush1.msra.mxu0 0.0
    %1292 = vmatprep.subr.mxu0 0.0
    %1293 = vmatpush1.msra.mxu0 0.0
    %1294 = vmatprep.subr.mxu0 0.0
    %1295 = vmatpush1.msra.mxu0 0.0
    %1296 = vmatprep.mubr.f32.mxu0 0.0
    %1297 = vmatmul.mubr.f32.gmra.mrb[0].mxu0 %v37
    %v1298 = vpop.f32.mrb[0].mxu0
    %v1299 = vadd.f32 %v1017, %v1298
    %v1300 = vpop.f32.mrb[0].mxu0
    %1301 = vdwg.mxu0
    %vm1302 = vcmask 31744
    %v1304 = vsel %vm1302, %v478, 0
    %v1307 = vsel %vm1302, %v785, 0
    %1309 = vmatprep.subr.mxu0 0.0
    %1310 = vmatpush1.xpose.msra.mxu0 %v1307
    %1311 = vmatprep.subr.mxu0 0.0
    %1312 = vmatpush1.xpose.msra.mxu0 0.0
    %1313 = vmatprep.subr.mxu0 0.0
    %1314 = vmatpush1.xpose.msra.mxu0 0.0
    %1315 = vmatprep.subr.mxu0 0.0
    %1316 = vmatpush1.xpose.msra.mxu0 0.0
    %1317 = vmatprep.subr.mxu0 0.0
    %1318 = vmatpush1.xpose.msra.mxu0 0.0
    %1319 = vmatprep.subr.mxu0 0.0
    %1320 = vmatpush1.xpose.msra.mxu0 0.0
    %1321 = vmatprep.subr.mxu0 0.0
    %1322 = vmatpush1.xpose.msra.mxu0 0.0
    %1323 = vmatprep.subr.mxu0 0.0
    %1324 = vmatpush1.xpose.msra.mxu0 0.0
    %1325 = vmatprep.subr.mxu0 0.0
    %1326 = vmatpush1.xpose.msra.mxu0 0.0
    %1327 = vmatprep.subr.mxu0 0.0
    %1328 = vmatpush1.xpose.msra.mxu0 0.0
    %1329 = vmatprep.subr.mxu0 0.0
    %1330 = vmatpush1.xpose.msra.mxu0 0.0
    %1331 = vmatprep.subr.mxu0 0.0
    %1332 = vmatpush1.xpose.msra.mxu0 0.0
    %1333 = vmatprep.subr.mxu0 0.0
    %1334 = vmatpush1.xpose.msra.mxu0 0.0
    %1335 = vmatprep.subr.mxu0 0.0
    %1336 = vmatpush1.xpose.msra.mxu0 0.0
    %1337 = vmatprep.subr.mxu0 0.0
    %1338 = vmatpush1.xpose.msra.mxu0 0.0
    %1339 = vmatprep.subr.mxu0 0.0
    %1340 = vmatpush1.xpose.msra.mxu0 0.0
    %1341 = vmatprep.subr.mxu0 0.0
    %1342 = vmatpush1.xpose.msra.mxu0 0.0
    %1343 = vmatprep.subr.mxu0 0.0
    %1344 = vmatpush1.xpose.msra.mxu0 0.0
    %1345 = vmatprep.subr.mxu0 0.0
    %1346 = vmatpush1.xpose.msra.mxu0 0.0
    %1347 = vmatprep.subr.mxu0 0.0
    %1348 = vmatpush1.xpose.msra.mxu0 0.0
    %1349 = vmatprep.subr.mxu0 0.0
    %1350 = vmatpush1.xpose.msra.mxu0 0.0
    %1351 = vmatprep.subr.mxu0 0.0
    %1352 = vmatpush1.xpose.msra.mxu0 0.0
    %1353 = vmatprep.subr.mxu0 0.0
    %1354 = vmatpush1.xpose.msra.mxu0 0.0
    %1355 = vmatprep.subr.mxu0 0.0
    %1356 = vmatpush1.xpose.msra.mxu0 0.0
    %1357 = vmatprep.subr.mxu0 0.0
    %1358 = vmatpush1.xpose.msra.mxu0 0.0
    %1359 = vmatprep.subr.mxu0 0.0
    %1360 = vmatpush1.xpose.msra.mxu0 0.0
    %1361 = vmatprep.subr.mxu0 0.0
    %1362 = vmatpush1.xpose.msra.mxu0 0.0
    %1363 = vmatprep.subr.mxu0 0.0
    %1364 = vmatpush1.xpose.msra.mxu0 0.0
    %1365 = vmatprep.subr.mxu0 0.0
    %1366 = vmatpush1.xpose.msra.mxu0 0.0
    %1367 = vmatprep.subr.mxu0 0.0
    %1368 = vmatpush1.xpose.msra.mxu0 0.0
    %1369 = vmatprep.subr.mxu0 0.0
    %1370 = vmatpush1.xpose.msra.mxu0 0.0
    %1371 = vmatprep.subr.mxu0 0.0
    %1372 = vmatpush1.xpose.msra.mxu0 0.0
    %1373 = vmatprep.mubr.f32.mxu0 0.0
    %1374 = vmatmul.mubr.f32.gmra.mrb[0].mxu0 %v1304
    %v1375 = vpop.f32.mrb[0].mxu0
    %v1376 = vadd.f32 0.0, %v1375
    %v1377 = vpop.f32.mrb[0].mxu0
    %1378 = vdwg.mxu0
    %v1380 = vsel %vm1302, %v548, 0
    %v1383 = vsel %vm1302, %v855, 0
    %1385 = vmatprep.subr.mxu0 0.0
    %1386 = vmatpush1.xpose.msra.mxu0 %v1383
    %1387 = vmatprep.subr.mxu0 0.0
    %1388 = vmatpush1.xpose.msra.mxu0 0.0
    %1389 = vmatprep.subr.mxu0 0.0
    %1390 = vmatpush1.xpose.msra.mxu0 0.0
    %1391 = vmatprep.subr.mxu0 0.0
    %1392 = vmatpush1.xpose.msra.mxu0 0.0
    %1393 = vmatprep.subr.mxu0 0.0
    %1394 = vmatpush1.xpose.msra.mxu0 0.0
    %1395 = vmatprep.subr.mxu0 0.0
    %1396 = vmatpush1.xpose.msra.mxu0 0.0
    %1397 = vmatprep.subr.mxu0 0.0
    %1398 = vmatpush1.xpose.msra.mxu0 0.0
    %1399 = vmatprep.subr.mxu0 0.0
    %1400 = vmatpush1.xpose.msra.mxu0 0.0
    %1401 = vmatprep.subr.mxu0 0.0
    %1402 = vmatpush1.xpose.msra.mxu0 0.0
    %1403 = vmatprep.subr.mxu0 0.0
    %1404 = vmatpush1.xpose.msra.mxu0 0.0
    %1405 = vmatprep.subr.mxu0 0.0
    %1406 = vmatpush1.xpose.msra.mxu0 0.0
    %1407 = vmatprep.subr.mxu0 0.0
    %1408 = vmatpush1.xpose.msra.mxu0 0.0
    %1409 = vmatprep.subr.mxu0 0.0
    %1410 = vmatpush1.xpose.msra.mxu0 0.0
    %1411 = vmatprep.subr.mxu0 0.0
    %1412 = vmatpush1.xpose.msra.mxu0 0.0
    %1413 = vmatprep.subr.mxu0 0.0
    %1414 = vmatpush1.xpose.msra.mxu0 0.0
    %1415 = vmatprep.subr.mxu0 0.0
    %1416 = vmatpush1.xpose.msra.mxu0 0.0
    %1417 = vmatprep.subr.mxu0 0.0
    %1418 = vmatpush1.xpose.msra.mxu0 0.0
    %1419 = vmatprep.subr.mxu0 0.0
    %1420 = vmatpush1.xpose.msra.mxu0 0.0
    %1421 = vmatprep.subr.mxu0 0.0
    %1422 = vmatpush1.xpose.msra.mxu0 0.0
    %1423 = vmatprep.subr.mxu0 0.0
    %1424 = vmatpush1.xpose.msra.mxu0 0.0
    %1425 = vmatprep.subr.mxu0 0.0
    %1426 = vmatpush1.xpose.msra.mxu0 0.0
    %1427 = vmatprep.subr.mxu0 0.0
    %1428 = vmatpush1.xpose.msra.mxu0 0.0
    %1429 = vmatprep.subr.mxu0 0.0
    %1430 = vmatpush1.xpose.msra.mxu0 0.0
    %1431 = vmatprep.subr.mxu0 0.0
    %1432 = vmatpush1.xpose.msra.mxu0 0.0
    %1433 = vmatprep.subr.mxu0 0.0
    %1434 = vmatpush1.xpose.msra.mxu0 0.0
    %1435 = vmatprep.subr.mxu0 0.0
    %1436 = vmatpush1.xpose.msra.mxu0 0.0
    %1437 = vmatprep.subr.mxu0 0.0
    %1438 = vmatpush1.xpose.msra.mxu0 0.0
    %1439 = vmatprep.subr.mxu0 0.0
    %1440 = vmatpush1.xpose.msra.mxu0 0.0
    %1441 = vmatprep.subr.mxu0 0.0
    %1442 = vmatpush1.xpose.msra.mxu0 0.0
    %1443 = vmatprep.subr.mxu0 0.0
    %1444 = vmatpush1.xpose.msra.mxu0 0.0
    %1445 = vmatprep.subr.mxu0 0.0
    %1446 = vmatpush1.xpose.msra.mxu0 0.0
    %1447 = vmatprep.subr.mxu0 0.0
    %1448 = vmatpush1.xpose.msra.mxu0 0.0
    %1449 = vmatprep.mubr.f32.mxu0 0.0
    %1450 = vmatmul.mubr.f32.gmra.mrb[0].mxu0 %v1380
    %v1451 = vpop.f32.mrb[0].mxu0
    %v1452 = vadd.f32 0.0, %v1451
    %v1453 = vpop.f32.mrb[0].mxu0
    %1454 = vdwg.mxu0
    %v1456 = vsel %vm1302, %v618, 0
    %v1459 = vsel %vm1302, %v925, 0
    %1461 = vmatprep.subr.mxu0 0.0
    %1462 = vmatpush1.xpose.msra.mxu0 %v1459
    %1463 = vmatprep.subr.mxu0 0.0
    %1464 = vmatpush1.xpose.msra.mxu0 0.0
    %1465 = vmatprep.subr.mxu0 0.0
    %1466 = vmatpush1.xpose.msra.mxu0 0.0
    %1467 = vmatprep.subr.mxu0 0.0
    %1468 = vmatpush1.xpose.msra.mxu0 0.0
    %1469 = vmatprep.subr.mxu0 0.0
    %1470 = vmatpush1.xpose.msra.mxu0 0.0
    %1471 = vmatprep.subr.mxu0 0.0
    %1472 = vmatpush1.xpose.msra.mxu0 0.0
    %1473 = vmatprep.subr.mxu0 0.0
    %1474 = vmatpush1.xpose.msra.mxu0 0.0
    %1475 = vmatprep.subr.mxu0 0.0
    %1476 = vmatpush1.xpose.msra.mxu0 0.0
    %1477 = vmatprep.subr.mxu0 0.0
    %1478 = vmatpush1.xpose.msra.mxu0 0.0
    %1479 = vmatprep.subr.mxu0 0.0
    %1480 = vmatpush1.xpose.msra.mxu0 0.0
    %1481 = vmatprep.subr.mxu0 0.0
    %1482 = vmatpush1.xpose.msra.mxu0 0.0
    %1483 = vmatprep.subr.mxu0 0.0
    %1484 = vmatpush1.xpose.msra.mxu0 0.0
    %1485 = vmatprep.subr.mxu0 0.0
    %1486 = vmatpush1.xpose.msra.mxu0 0.0
    %1487 = vmatprep.subr.mxu0 0.0
    %1488 = vmatpush1.xpose.msra.mxu0 0.0
    %1489 = vmatprep.subr.mxu0 0.0
    %1490 = vmatpush1.xpose.msra.mxu0 0.0
    %1491 = vmatprep.subr.mxu0 0.0
    %1492 = vmatpush1.xpose.msra.mxu0 0.0
    %1493 = vmatprep.subr.mxu0 0.0
    %1494 = vmatpush1.xpose.msra.mxu0 0.0
    %1495 = vmatprep.subr.mxu0 0.0
    %1496 = vmatpush1.xpose.msra.mxu0 0.0
    %1497 = vmatprep.subr.mxu0 0.0
    %1498 = vmatpush1.xpose.msra.mxu0 0.0
    %1499 = vmatprep.subr.mxu0 0.0
    %1500 = vmatpush1.xpose.msra.mxu0 0.0
    %1501 = vmatprep.subr.mxu0 0.0
    %1502 = vmatpush1.xpose.msra.mxu0 0.0
    %1503 = vmatprep.subr.mxu0 0.0
    %1504 = vmatpush1.xpose.msra.mxu0 0.0
    %1505 = vmatprep.subr.mxu0 0.0
    %1506 = vmatpush1.xpose.msra.mxu0 0.0
    %1507 = vmatprep.subr.mxu0 0.0
    %1508 = vmatpush1.xpose.msra.mxu0 0.0
    %1509 = vmatprep.subr.mxu0 0.0
    %1510 = vmatpush1.xpose.msra.mxu0 0.0
    %1511 = vmatprep.subr.mxu0 0.0
    %1512 = vmatpush1.xpose.msra.mxu0 0.0
    %1513 = vmatprep.subr.mxu0 0.0
    %1514 = vmatpush1.xpose.msra.mxu0 0.0
    %1515 = vmatprep.subr.mxu0 0.0
    %1516 = vmatpush1.xpose.msra.mxu0 0.0
    %1517 = vmatprep.subr.mxu0 0.0
    %1518 = vmatpush1.xpose.msra.mxu0 0.0
    %1519 = vmatprep.subr.mxu0 0.0
    %1520 = vmatpush1.xpose.msra.mxu0 0.0
    %1521 = vmatprep.subr.mxu0 0.0
    %1522 = vmatpush1.xpose.msra.mxu0 0.0
    %1523 = vmatprep.subr.mxu0 0.0
    %1524 = vmatpush1.xpose.msra.mxu0 0.0
    %1525 = vmatprep.mubr.f32.mxu0 0.0
    %1526 = vmatmul.mubr.f32.gmra.mrb[0].mxu0 %v1456
    %v1527 = vpop.f32.mrb[0].mxu0
    %v1528 = vadd.f32 0.0, %v1527
    %v1529 = vpop.f32.mrb[0].mxu0
    %1530 = vdwg.mxu0
    %v1532 = vsel %vm1302, %v688, 0
    %v1535 = vsel %vm1302, %v995, 0
    %1537 = vmatprep.subr.mxu0 0.0
    %1538 = vmatpush1.xpose.msra.mxu0 %v1535
    %1539 = vmatprep.subr.mxu0 0.0
    %1540 = vmatpush1.xpose.msra.mxu0 0.0
    %1541 = vmatprep.subr.mxu0 0.0
    %1542 = vmatpush1.xpose.msra.mxu0 0.0
    %1543 = vmatprep.subr.mxu0 0.0
    %1544 = vmatpush1.xpose.msra.mxu0 0.0
    %1545 = vmatprep.subr.mxu0 0.0
    %1546 = vmatpush1.xpose.msra.mxu0 0.0
    %1547 = vmatprep.subr.mxu0 0.0
    %1548 = vmatpush1.xpose.msra.mxu0 0.0
    %1549 = vmatprep.subr.mxu0 0.0
    %1550 = vmatpush1.xpose.msra.mxu0 0.0
    %1551 = vmatprep.subr.mxu0 0.0
    %1552 = vmatpush1.xpose.msra.mxu0 0.0
    %1553 = vmatprep.subr.mxu0 0.0
    %1554 = vmatpush1.xpose.msra.mxu0 0.0
    %1555 = vmatprep.subr.mxu0 0.0
    %1556 = vmatpush1.xpose.msra.mxu0 0.0
    %1557 = vmatprep.subr.mxu0 0.0
    %1558 = vmatpush1.xpose.msra.mxu0 0.0
    %1559 = vmatprep.subr.mxu0 0.0
    %1560 = vmatpush1.xpose.msra.mxu0 0.0
    %1561 = vmatprep.subr.mxu0 0.0
    %1562 = vmatpush1.xpose.msra.mxu0 0.0
    %1563 = vmatprep.subr.mxu0 0.0
    %1564 = vmatpush1.xpose.msra.mxu0 0.0
    %1565 = vmatprep.subr.mxu0 0.0
    %1566 = vmatpush1.xpose.msra.mxu0 0.0
    %1567 = vmatprep.subr.mxu0 0.0
    %1568 = vmatpush1.xpose.msra.mxu0 0.0
    %1569 = vmatprep.subr.mxu0 0.0
    %1570 = vmatpush1.xpose.msra.mxu0 0.0
    %1571 = vmatprep.subr.mxu0 0.0
    %1572 = vmatpush1.xpose.msra.mxu0 0.0
    %1573 = vmatprep.subr.mxu0 0.0
    %1574 = vmatpush1.xpose.msra.mxu0 0.0
    %1575 = vmatprep.subr.mxu0 0.0
    %1576 = vmatpush1.xpose.msra.mxu0 0.0
    %1577 = vmatprep.subr.mxu0 0.0
    %1578 = vmatpush1.xpose.msra.mxu0 0.0
    %1579 = vmatprep.subr.mxu0 0.0
    %1580 = vmatpush1.xpose.msra.mxu0 0.0
    %1581 = vmatprep.subr.mxu0 0.0
    %1582 = vmatpush1.xpose.msra.mxu0 0.0
    %1583 = vmatprep.subr.mxu0 0.0
    %1584 = vmatpush1.xpose.msra.mxu0 0.0
    %1585 = vmatprep.subr.mxu0 0.0
    %1586 = vmatpush1.xpose.msra.mxu0 0.0
    %1587 = vmatprep.subr.mxu0 0.0
    %1588 = vmatpush1.xpose.msra.mxu0 0.0
    %1589 = vmatprep.subr.mxu0 0.0
    %1590 = vmatpush1.xpose.msra.mxu0 0.0
    %1591 = vmatprep.subr.mxu0 0.0
    %1592 = vmatpush1.xpose.msra.mxu0 0.0
    %1593 = vmatprep.subr.mxu0 0.0
    %1594 = vmatpush1.xpose.msra.mxu0 0.0
    %1595 = vmatprep.subr.mxu0 0.0
    %1596 = vmatpush1.xpose.msra.mxu0 0.0
    %1597 = vmatprep.subr.mxu0 0.0
    %1598 = vmatpush1.xpose.msra.mxu0 0.0
    %1599 = vmatprep.subr.mxu0 0.0
    %1600 = vmatpush1.xpose.msra.mxu0 0.0
    %1601 = vmatprep.mubr.f32.mxu0 0.0
    %1602 = vmatmul.mubr.f32.gmra.mrb[0].mxu0 %v1532
    %v1603 = vpop.f32.mrb[0].mxu0
    %v1604 = vadd.f32 0.0, %v1603
    %v1605 = vpop.f32.mrb[0].mxu0
    %1606 = vdwg.mxu0
    %v1607 = vmul.f32 %v1376, 0.5
    %v1608 = vmul.f32 %v1452, 0.5
    %v1609 = vmul.f32 %v1528, 0.5
    %v1610 = vmul.f32 %v1604, 0.5
    %v1611 = vadd.f32 %v1607, %v30
    %v1612 = vadd.f32 %v1608, %v30
    %v1613 = vadd.f32 %v1609, %v30
    %v1614 = vadd.f32 %v1610, %v30
    %vm1615 = vcmask 64512
    %v1616 = vsel %vm1615, %v1611, -inf
    %1617 = vmax.xlane.f32.xlu0 %v1616
    %v1618 = vpop.xlane.xlu0 %1617
    %v1619 = vsel %vm1615, %v1612, -inf
    %1620 = vmax.xlane.f32.xlu0 %v1619
    %v1621 = vpop.xlane.xlu0 %1620
    %v1622 = vsel %vm1615, %v1613, -inf
    %1623 = vmax.xlane.f32.xlu0 %v1622
    %v1624 = vpop.xlane.xlu0 %1623
    %v1625 = vsel %vm1615, %v1614, -inf
    %1626 = vmax.xlane.f32.xlu0 %v1625
    %v1627 = vpop.xlane.xlu0 %1626
    %v1628 = vsub.f32 %v1611, %v1618
    %v1629 = vsub.f32 %v1612, %v1621
    %v1630 = vsub.f32 %v1613, %v1624
    %v1631 = vsub.f32 %v1614, %v1627
    %v1632 = vmul.f32 %v1628, 1.442695
    %v1633 = vpow.pop %v1632
    %v1634 = vmul.f32 %v1629, 1.442695
    %v1635 = vpow.pop %v1634
    %v1636 = vmul.f32 %v1630, 1.442695
    %v1637 = vpow.pop %v1636
    %v1638 = vmul.f32 %v1631, 1.442695
    %v1639 = vpow.pop %v1638
    %v1640 = vsel %vm1615, %v1633, 0.0
    %1641 = vadd.xlane.f32.xlu0 %v1640
    %v1642 = vpop.xlane.xlu0 %1641
    %v1643 = vsel %vm1615, %v1635, 0.0
    %1644 = vadd.xlane.f32.xlu0 %v1643
    %v1645 = vpop.xlane.xlu0 %1644
    %v1646 = vsel %vm1615, %v1637, 0.0
    %1647 = vadd.xlane.f32.xlu0 %v1646
    %v1648 = vpop.xlane.xlu0 %1647
    %v1649 = vsel %vm1615, %v1639, 0.0
    %1650 = vadd.xlane.f32.xlu0 %v1649
    %v1651 = vpop.xlane.xlu0 %1650
    %v1652 = vrcp.pop %v1642
    %v1653 = vmul.f32 %v1633, %v1652
    %v1654 = vrcp.pop %v1645
    %v1655 = vmul.f32 %v1635, %v1654
    %v1656 = vrcp.pop %v1648
    %v1657 = vmul.f32 %v1637, %v1656
    %v1658 = vrcp.pop %v1651
    %v1659 = vmul.f32 %v1639, %v1658
    %v1661 = vsel %vm1615, %v1653, 0
    %1663 = vmatprep.subr.mxu0 0.0
    %1664 = vmatpush1.msra.mxu0 %v1089
    %1665 = vmatprep.subr.mxu0 0.0
    %1666 = vmatpush1.msra.mxu0 0.0
    %1667 = vmatprep.subr.mxu0 0.0
    %1668 = vmatpush1.msra.mxu0 0.0
    %1669 = vmatprep.subr.mxu0 0.0
    %1670 = vmatpush1.msra.mxu0 0.0
    %1671 = vmatprep.subr.mxu0 0.0
    %1672 = vmatpush1.msra.mxu0 0.0
    %1673 = vmatprep.subr.mxu0 0.0
    %1674 = vmatpush1.msra.mxu0 0.0
    %1675 = vmatprep.subr.mxu0 0.0
    %1676 = vmatpush1.msra.mxu0 0.0
    %1677 = vmatprep.subr.mxu0 0.0
    %1678 = vmatpush1.msra.mxu0 0.0
    %1679 = vmatprep.subr.mxu0 0.0
    %1680 = vmatpush1.msra.mxu0 0.0
    %1681 = vmatprep.subr.mxu0 0.0
    %1682 = vmatpush1.msra.mxu0 0.0
    %1683 = vmatprep.subr.mxu0 0.0
    %1684 = vmatpush1.msra.mxu0 0.0
    %1685 = vmatprep.subr.mxu0 0.0
    %1686 = vmatpush1.msra.mxu0 0.0
    %1687 = vmatprep.subr.mxu0 0.0
    %1688 = vmatpush1.msra.mxu0 0.0
    %1689 = vmatprep.subr.mxu0 0.0
    %1690 = vmatpush1.msra.mxu0 0.0
    %1691 = vmatprep.subr.mxu0 0.0
    %1692 = vmatpush1.msra.mxu0 0.0
    %1693 = vmatprep.subr.mxu0 0.0
    %1694 = vmatpush1.msra.mxu0 0.0
    %1695 = vmatprep.subr.mxu0 0.0
    %1696 = vmatpush1.msra.mxu0 0.0
    %1697 = vmatprep.subr.mxu0 0.0
    %1698 = vmatpush1.msra.mxu0 0.0
    %1699 = vmatprep.subr.mxu0 0.0
    %1700 = vmatpush1.msra.mxu0 0.0
    %1701 = vmatprep.subr.mxu0 0.0
    %1702 = vmatpush1.msra.mxu0 0.0
    %1703 = vmatprep.subr.mxu0 0.0
    %1704 = vmatpush1.msra.mxu0 0.0
    %1705 = vmatprep.subr.mxu0 0.0
    %1706 = vmatpush1.msra.mxu0 0.0
    %1707 = vmatprep.subr.mxu0 0.0
    %1708 = vmatpush1.msra.mxu0 0.0
    %1709 = vmatprep.subr.mxu0 0.0
    %1710 = vmatpush1.msra.mxu0 0.0
    %1711 = vmatprep.subr.mxu0 0.0
    %1712 = vmatpush1.msra.mxu0 0.0
    %1713 = vmatprep.subr.mxu0 0.0
    %1714 = vmatpush1.msra.mxu0 0.0
    %1715 = vmatprep.subr.mxu0 0.0
    %1716 = vmatpush1.msra.mxu0 0.0
    %1717 = vmatprep.subr.mxu0 0.0
    %1718 = vmatpush1.msra.mxu0 0.0
    %1719 = vmatprep.subr.mxu0 0.0
    %1720 = vmatpush1.msra.mxu0 0.0
    %1721 = vmatprep.subr.mxu0 0.0
    %1722 = vmatpush1.msra.mxu0 0.0
    %1723 = vmatprep.subr.mxu0 0.0
    %1724 = vmatpush1.msra.mxu0 0.0
    %1725 = vmatprep.subr.mxu0 0.0
    %1726 = vmatpush1.msra.mxu0 0.0
    %1727 = vmatprep.mubr.f32.mxu0 0.0
    %1728 = vmatmul.mubr.f32.gmra.mrb[0].mxu0 %v1661
    %v1729 = vpop.f32.mrb[0].mxu0
    %v1730 = vadd.f32 0.0, %v1729
    %v1731 = vpop.f32.mrb[0].mxu0
    %1732 = vdwg.mxu0
    %v1734 = vsel %vm1615, %v1655, 0
    %1736 = vmatprep.subr.mxu0 0.0
    %1737 = vmatpush1.msra.mxu0 %v1159
    %1738 = vmatprep.subr.mxu0 0.0
    %1739 = vmatpush1.msra.mxu0 0.0
    %1740 = vmatprep.subr.mxu0 0.0
    %1741 = vmatpush1.msra.mxu0 0.0
    %1742 = vmatprep.subr.mxu0 0.0
    %1743 = vmatpush1.msra.mxu0 0.0
    %1744 = vmatprep.subr.mxu0 0.0
    %1745 = vmatpush1.msra.mxu0 0.0
    %1746 = vmatprep.subr.mxu0 0.0
    %1747 = vmatpush1.msra.mxu0 0.0
    %1748 = vmatprep.subr.mxu0 0.0
    %1749 = vmatpush1.msra.mxu0 0.0
    %1750 = vmatprep.subr.mxu0 0.0
    %1751 = vmatpush1.msra.mxu0 0.0
    %1752 = vmatprep.subr.mxu0 0.0
    %1753 = vmatpush1.msra.mxu0 0.0
    %1754 = vmatprep.subr.mxu0 0.0
    %1755 = vmatpush1.msra.mxu0 0.0
    %1756 = vmatprep.subr.mxu0 0.0
    %1757 = vmatpush1.msra.mxu0 0.0
    %1758 = vmatprep.subr.mxu0 0.0
    %1759 = vmatpush1.msra.mxu0 0.0
    %1760 = vmatprep.subr.mxu0 0.0
    %1761 = vmatpush1.msra.mxu0 0.0
    %1762 = vmatprep.subr.mxu0 0.0
    %1763 = vmatpush1.msra.mxu0 0.0
    %1764 = vmatprep.subr.mxu0 0.0
    %1765 = vmatpush1.msra.mxu0 0.0
    %1766 = vmatprep.subr.mxu0 0.0
    %1767 = vmatpush1.msra.mxu0 0.0
    %1768 = vmatprep.subr.mxu0 0.0
    %1769 = vmatpush1.msra.mxu0 0.0
    %1770 = vmatprep.subr.mxu0 0.0
    %1771 = vmatpush1.msra.mxu0 0.0
    %1772 = vmatprep.subr.mxu0 0.0
    %1773 = vmatpush1.msra.mxu0 0.0
    %1774 = vmatprep.subr.mxu0 0.0
    %1775 = vmatpush1.msra.mxu0 0.0
    %1776 = vmatprep.subr.mxu0 0.0
    %1777 = vmatpush1.msra.mxu0 0.0
    %1778 = vmatprep.subr.mxu0 0.0
    %1779 = vmatpush1.msra.mxu0 0.0
    %1780 = vmatprep.subr.mxu0 0.0
    %1781 = vmatpush1.msra.mxu0 0.0
    %1782 = vmatprep.subr.mxu0 0.0
    %1783 = vmatpush1.msra.mxu0 0.0
    %1784 = vmatprep.subr.mxu0 0.0
    %1785 = vmatpush1.msra.mxu0 0.0
    %1786 = vmatprep.subr.mxu0 0.0
    %1787 = vmatpush1.msra.mxu0 0.0
    %1788 = vmatprep.subr.mxu0 0.0
    %1789 = vmatpush1.msra.mxu0 0.0
    %1790 = vmatprep.subr.mxu0 0.0
    %1791 = vmatpush1.msra.mxu0 0.0
    %1792 = vmatprep.subr.mxu0 0.0
    %1793 = vmatpush1.msra.mxu0 0.0
    %1794 = vmatprep.subr.mxu0 0.0
    %1795 = vmatpush1.msra.mxu0 0.0
    %1796 = vmatprep.subr.mxu0 0.0
    %1797 = vmatpush1.msra.mxu0 0.0
    %1798 = vmatprep.subr.mxu0 0.0
    %1799 = vmatpush1.msra.mxu0 0.0
    %1800 = vmatprep.mubr.f32.mxu0 0.0
    %1801 = vmatmul.mubr.f32.gmra.mrb[0].mxu0 %v1734
    %v1802 = vpop.f32.mrb[0].mxu0
    %v1803 = vadd.f32 0.0, %v1802
    %v1804 = vpop.f32.mrb[0].mxu0
    %1805 = vdwg.mxu0
    %v1807 = vsel %vm1615, %v1657, 0
    %1809 = vmatprep.subr.mxu0 0.0
    %1810 = vmatpush1.msra.mxu0 %v1229
    %1811 = vmatprep.subr.mxu0 0.0
    %1812 = vmatpush1.msra.mxu0 0.0
    %1813 = vmatprep.subr.mxu0 0.0
    %1814 = vmatpush1.msra.mxu0 0.0
    %1815 = vmatprep.subr.mxu0 0.0
    %1816 = vmatpush1.msra.mxu0 0.0
    %1817 = vmatprep.subr.mxu0 0.0
    %1818 = vmatpush1.msra.mxu0 0.0
    %1819 = vmatprep.subr.mxu0 0.0
    %1820 = vmatpush1.msra.mxu0 0.0
    %1821 = vmatprep.subr.mxu0 0.0
    %1822 = vmatpush1.msra.mxu0 0.0
    %1823 = vmatprep.subr.mxu0 0.0
    %1824 = vmatpush1.msra.mxu0 0.0
    %1825 = vmatprep.subr.mxu0 0.0
    %1826 = vmatpush1.msra.mxu0 0.0
    %1827 = vmatprep.subr.mxu0 0.0
    %1828 = vmatpush1.msra.mxu0 0.0
    %1829 = vmatprep.subr.mxu0 0.0
    %1830 = vmatpush1.msra.mxu0 0.0
    %1831 = vmatprep.subr.mxu0 0.0
    %1832 = vmatpush1.msra.mxu0 0.0
    %1833 = vmatprep.subr.mxu0 0.0
    %1834 = vmatpush1.msra.mxu0 0.0
    %1835 = vmatprep.subr.mxu0 0.0
    %1836 = vmatpush1.msra.mxu0 0.0
    %1837 = vmatprep.subr.mxu0 0.0
    %1838 = vmatpush1.msra.mxu0 0.0
    %1839 = vmatprep.subr.mxu0 0.0
    %1840 = vmatpush1.msra.mxu0 0.0
    %1841 = vmatprep.subr.mxu0 0.0
    %1842 = vmatpush1.msra.mxu0 0.0
    %1843 = vmatprep.subr.mxu0 0.0
    %1844 = vmatpush1.msra.mxu0 0.0
    %1845 = vmatprep.subr.mxu0 0.0
    %1846 = vmatpush1.msra.mxu0 0.0
    %1847 = vmatprep.subr.mxu0 0.0
    %1848 = vmatpush1.msra.mxu0 0.0
    %1849 = vmatprep.subr.mxu0 0.0
    %1850 = vmatpush1.msra.mxu0 0.0
    %1851 = vmatprep.subr.mxu0 0.0
    %1852 = vmatpush1.msra.mxu0 0.0
    %1853 = vmatprep.subr.mxu0 0.0
    %1854 = vmatpush1.msra.mxu0 0.0
    %1855 = vmatprep.subr.mxu0 0.0
    %1856 = vmatpush1.msra.mxu0 0.0
    %1857 = vmatprep.subr.mxu0 0.0
    %1858 = vmatpush1.msra.mxu0 0.0
    %1859 = vmatprep.subr.mxu0 0.0
    %1860 = vmatpush1.msra.mxu0 0.0
    %1861 = vmatprep.subr.mxu0 0.0
    %1862 = vmatpush1.msra.mxu0 0.0
    %1863 = vmatprep.subr.mxu0 0.0
    %1864 = vmatpush1.msra.mxu0 0.0
    %1865 = vmatprep.subr.mxu0 0.0
    %1866 = vmatpush1.msra.mxu0 0.0
    %1867 = vmatprep.subr.mxu0 0.0
    %1868 = vmatpush1.msra.mxu0 0.0
    %1869 = vmatprep.subr.mxu0 0.0
    %1870 = vmatpush1.msra.mxu0 0.0
    %1871 = vmatprep.subr.mxu0 0.0
    %1872 = vmatpush1.msra.mxu0 0.0
    %1873 = vmatprep.mubr.f32.mxu0 0.0
    %1874 = vmatmul.mubr.f32.gmra.mrb[0].mxu0 %v1807
    %v1875 = vpop.f32.mrb[0].mxu0
    %v1876 = vadd.f32 0.0, %v1875
    %v1877 = vpop.f32.mrb[0].mxu0
    %1878 = vdwg.mxu0
    %v1880 = vsel %vm1615, %v1659, 0
    %1882 = vmatprep.subr.mxu0 0.0
    %1883 = vmatpush1.msra.mxu0 %v1299
    %1884 = vmatprep.subr.mxu0 0.0
    %1885 = vmatpush1.msra.mxu0 0.0
    %1886 = vmatprep.subr.mxu0 0.0
    %1887 = vmatpush1.msra.mxu0 0.0
    %1888 = vmatprep.subr.mxu0 0.0
    %1889 = vmatpush1.msra.mxu0 0.0
    %1890 = vmatprep.subr.mxu0 0.0
    %1891 = vmatpush1.msra.mxu0 0.0
    %1892 = vmatprep.subr.mxu0 0.0
    %1893 = vmatpush1.msra.mxu0 0.0
    %1894 = vmatprep.subr.mxu0 0.0
    %1895 = vmatpush1.msra.mxu0 0.0
    %1896 = vmatprep.subr.mxu0 0.0
    %1897 = vmatpush1.msra.mxu0 0.0
    %1898 = vmatprep.subr.mxu0 0.0
    %1899 = vmatpush1.msra.mxu0 0.0
    %1900 = vmatprep.subr.mxu0 0.0
    %1901 = vmatpush1.msra.mxu0 0.0
    %1902 = vmatprep.subr.mxu0 0.0
    %1903 = vmatpush1.msra.mxu0 0.0
    %1904 = vmatprep.subr.mxu0 0.0
    %1905 = vmatpush1.msra.mxu0 0.0
    %1906 = vmatprep.subr.mxu0 0.0
    %1907 = vmatpush1.msra.mxu0 0.0
    %1908 = vmatprep.subr.mxu0 0.0
    %1909 = vmatpush1.msra.mxu0 0.0
    %1910 = vmatprep.subr.mxu0 0.0
    %1911 = vmatpush1.msra.mxu0 0.0
    %1912 = vmatprep.subr.mxu0 0.0
    %1913 = vmatpush1.msra.mxu0 0.0
    %1914 = vmatprep.subr.mxu0 0.0
    %1915 = vmatpush1.msra.mxu0 0.0
    %1916 = vmatprep.subr.mxu0 0.0
    %1917 = vmatpush1.msra.mxu0 0.0
    %1918 = vmatprep.subr.mxu0 0.0
    %1919 = vmatpush1.msra.mxu0 0.0
    %1920 = vmatprep.subr.mxu0 0.0
    %1921 = vmatpush1.msra.mxu0 0.0
    %1922 = vmatprep.subr.mxu0 0.0
    %1923 = vmatpush1.msra.mxu0 0.0
    %1924 = vmatprep.subr.mxu0 0.0
    %1925 = vmatpush1.msra.mxu0 0.0
    %1926 = vmatprep.subr.mxu0 0.0
    %1927 = vmatpush1.msra.mxu0 0.0
    %1928 = vmatprep.subr.mxu0 0.0
    %1929 = vmatpush1.msra.mxu0 0.0
    %1930 = vmatprep.subr.mxu0 0.0
    %1931 = vmatpush1.msra.mxu0 0.0
    %1932 = vmatprep.subr.mxu0 0.0
    %1933 = vmatpush1.msra.mxu0 0.0
    %1934 = vmatprep.subr.mxu0 0.0
    %1935 = vmatpush1.msra.mxu0 0.0
    %1936 = vmatprep.subr.mxu0 0.0
    %1937 = vmatpush1.msra.mxu0 0.0
    %1938 = vmatprep.subr.mxu0 0.0
    %1939 = vmatpush1.msra.mxu0 0.0
    %1940 = vmatprep.subr.mxu0 0.0
    %1941 = vmatpush1.msra.mxu0 0.0
    %1942 = vmatprep.subr.mxu0 0.0
    %1943 = vmatpush1.msra.mxu0 0.0
    %1944 = vmatprep.subr.mxu0 0.0
    %1945 = vmatpush1.msra.mxu0 0.0
    %1946 = vmatprep.mubr.f32.mxu0 0.0
    %1947 = vmatmul.mubr.f32.gmra.mrb[0].mxu0 %v1880
    %v1948 = vpop.f32.mrb[0].mxu0
    %v1949 = vadd.f32 0.0, %v1948
    %v1950 = vpop.f32.mrb[0].mxu0
    %1951 = vdwg.mxu0
    %v1953 = vsel %vm1302, %v1730, 0
    %v1956 = vsel %vm1302, %v362, 0
    %v1959 = vsel %vm1302, %v363, 0
    %1961 = vmatprep.subr.mxu0 0.0
    %1962 = vmatpush1.xpose.msra.mxu0 %v1956
    %1963 = vmatprep.subr.mxu0 0.0
    %1964 = vmatpush1.xpose.msra.mxu0 %v1959
    %1965 = vmatprep.subr.mxu0 0.0
    %1966 = vmatpush1.xpose.msra.mxu0 0.0
    %1967 = vmatprep.subr.mxu0 0.0
    %1968 = vmatpush1.xpose.msra.mxu0 0.0
    %1969 = vmatprep.subr.mxu0 0.0
    %1970 = vmatpush1.xpose.msra.mxu0 0.0
    %1971 = vmatprep.subr.mxu0 0.0
    %1972 = vmatpush1.xpose.msra.mxu0 0.0
    %1973 = vmatprep.subr.mxu0 0.0
    %1974 = vmatpush1.xpose.msra.mxu0 0.0
    %1975 = vmatprep.subr.mxu0 0.0
    %1976 = vmatpush1.xpose.msra.mxu0 0.0
    %1977 = vmatprep.subr.mxu0 0.0
    %1978 = vmatpush1.xpose.msra.mxu0 0.0
    %1979 = vmatprep.subr.mxu0 0.0
    %1980 = vmatpush1.xpose.msra.mxu0 0.0
    %1981 = vmatprep.subr.mxu0 0.0
    %1982 = vmatpush1.xpose.msra.mxu0 0.0
    %1983 = vmatprep.subr.mxu0 0.0
    %1984 = vmatpush1.xpose.msra.mxu0 0.0
    %1985 = vmatprep.subr.mxu0 0.0
    %1986 = vmatpush1.xpose.msra.mxu0 0.0
    %1987 = vmatprep.subr.mxu0 0.0
    %1988 = vmatpush1.xpose.msra.mxu0 0.0
    %1989 = vmatprep.subr.mxu0 0.0
    %1990 = vmatpush1.xpose.msra.mxu0 0.0
    %1991 = vmatprep.subr.mxu0 0.0
    %1992 = vmatpush1.xpose.msra.mxu0 0.0
    %1993 = vmatprep.subr.mxu0 0.0
    %1994 = vmatpush1.xpose.msra.mxu0 0.0
    %1995 = vmatprep.subr.mxu0 0.0
    %1996 = vmatpush1.xpose.msra.mxu0 0.0
    %1997 = vmatprep.subr.mxu0 0.0
    %1998 = vmatpush1.xpose.msra.mxu0 0.0
    %1999 = vmatprep.subr.mxu0 0.0
    %2000 = vmatpush1.xpose.msra.mxu0 0.0
    %2001 = vmatprep.subr.mxu0 0.0
    %2002 = vmatpush1.xpose.msra.mxu0 0.0
    %2003 = vmatprep.subr.mxu0 0.0
    %2004 = vmatpush1.xpose.msra.mxu0 0.0
    %2005 = vmatprep.subr.mxu0 0.0
    %2006 = vmatpush1.xpose.msra.mxu0 0.0
    %2007 = vmatprep.subr.mxu0 0.0
    %2008 = vmatpush1.xpose.msra.mxu0 0.0
    %2009 = vmatprep.subr.mxu0 0.0
    %2010 = vmatpush1.xpose.msra.mxu0 0.0
    %2011 = vmatprep.subr.mxu0 0.0
    %2012 = vmatpush1.xpose.msra.mxu0 0.0
    %2013 = vmatprep.subr.mxu0 0.0
    %2014 = vmatpush1.xpose.msra.mxu0 0.0
    %2015 = vmatprep.subr.mxu0 0.0
    %2016 = vmatpush1.xpose.msra.mxu0 0.0
    %2017 = vmatprep.subr.mxu0 0.0
    %2018 = vmatpush1.xpose.msra.mxu0 0.0
    %2019 = vmatprep.subr.mxu0 0.0
    %2020 = vmatpush1.xpose.msra.mxu0 0.0
    %2021 = vmatprep.subr.mxu0 0.0
    %2022 = vmatpush1.xpose.msra.mxu0 0.0
    %2023 = vmatprep.subr.mxu0 0.0
    %2024 = vmatpush1.xpose.msra.mxu0 0.0
    %2025 = vmatprep.mubr.f32.mxu0 0.0
    %2026 = vmatmul.mubr.f32.gmra.mrb[0].mxu0 %v1953
    %v2027 = vpop.f32.mrb[0].mxu0
    %v2028 = vadd.f32 0.0, %v2027
    %v2029 = vpop.f32.mrb[0].mxu0
    %2030 = vdwg.mxu0
    %v2032 = vsel %vm1302, %v1803, 0
    %v2035 = vsel %vm1302, %v364, 0
    %v2038 = vsel %vm1302, %v365, 0
    %2040 = vmatprep.subr.mxu0 0.0
    %2041 = vmatpush1.xpose.msra.mxu0 %v2035
    %2042 = vmatprep.subr.mxu0 0.0
    %2043 = vmatpush1.xpose.msra.mxu0 %v2038
    %2044 = vmatprep.subr.mxu0 0.0
    %2045 = vmatpush1.xpose.msra.mxu0 0.0
    %2046 = vmatprep.subr.mxu0 0.0
    %2047 = vmatpush1.xpose.msra.mxu0 0.0
    %2048 = vmatprep.subr.mxu0 0.0
    %2049 = vmatpush1.xpose.msra.mxu0 0.0
    %2050 = vmatprep.subr.mxu0 0.0
    %2051 = vmatpush1.xpose.msra.mxu0 0.0
    %2052 = vmatprep.subr.mxu0 0.0
    %2053 = vmatpush1.xpose.msra.mxu0 0.0
    %2054 = vmatprep.subr.mxu0 0.0
    %2055 = vmatpush1.xpose.msra.mxu0 0.0
    %2056 = vmatprep.subr.mxu0 0.0
    %2057 = vmatpush1.xpose.msra.mxu0 0.0
    %2058 = vmatprep.subr.mxu0 0.0
    %2059 = vmatpush1.xpose.msra.mxu0 0.0
    %2060 = vmatprep.subr.mxu0 0.0
    %2061 = vmatpush1.xpose.msra.mxu0 0.0
    %2062 = vmatprep.subr.mxu0 0.0
    %2063 = vmatpush1.xpose.msra.mxu0 0.0
    %2064 = vmatprep.subr.mxu0 0.0
    %2065 = vmatpush1.xpose.msra.mxu0 0.0
    %2066 = vmatprep.subr.mxu0 0.0
    %2067 = vmatpush1.xpose.msra.mxu0 0.0
    %2068 = vmatprep.subr.mxu0 0.0
    %2069 = vmatpush1.xpose.msra.mxu0 0.0
    %2070 = vmatprep.subr.mxu0 0.0
    %2071 = vmatpush1.xpose.msra.mxu0 0.0
    %2072 = vmatprep.subr.mxu0 0.0
    %2073 = vmatpush1.xpose.msra.mxu0 0.0
    %2074 = vmatprep.subr.mxu0 0.0
    %2075 = vmatpush1.xpose.msra.mxu0 0.0
    %2076 = vmatprep.subr.mxu0 0.0
    %2077 = vmatpush1.xpose.msra.mxu0 0.0
    %2078 = vmatprep.subr.mxu0 0.0
    %2079 = vmatpush1.xpose.msra.mxu0 0.0
    %2080 = vmatprep.subr.mxu0 0.0
    %2081 = vmatpush1.xpose.msra.mxu0 0.0
    %2082 = vmatprep.subr.mxu0 0.0
    %2083 = vmatpush1.xpose.msra.mxu0 0.0
    %2084 = vmatprep.subr.mxu0 0.0
    %2085 = vmatpush1.xpose.msra.mxu0 0.0
    %2086 = vmatprep.subr.mxu0 0.0
    %2087 = vmatpush1.xpose.msra.mxu0 0.0
    %2088 = vmatprep.subr.mxu0 0.0
    %2089 = vmatpush1.xpose.msra.mxu0 0.0
    %2090 = vmatprep.subr.mxu0 0.0
    %2091 = vmatpush1.xpose.msra.mxu0 0.0
    %2092 = vmatprep.subr.mxu0 0.0
    %2093 = vmatpush1.xpose.msra.mxu0 0.0
    %2094 = vmatprep.subr.mxu0 0.0
    %2095 = vmatpush1.xpose.msra.mxu0 0.0
    %2096 = vmatprep.subr.mxu0 0.0
    %2097 = vmatpush1.xpose.msra.mxu0 0.0
    %2098 = vmatprep.subr.mxu0 0.0
    %2099 = vmatpush1.xpose.msra.mxu0 0.0
    %2100 = vmatprep.subr.mxu0 0.0
    %2101 = vmatpush1.xpose.msra.mxu0 0.0
    %2102 = vmatprep.subr.mxu0 0.0
    %2103 = vmatpush1.xpose.msra.mxu0 0.0
    %2104 = vmatprep.mubr.f32.mxu0 0.0
    %2105 = vmatmul.mubr.f32.gmra.mrb[0].mxu0 %v2032
    %v2106 = vpop.f32.mrb[0].mxu0
    %v2107 = vadd.f32 0.0, %v2106
    %v2108 = vpop.f32.mrb[0].mxu0
    %2109 = vdwg.mxu0
    %v2111 = vsel %vm1302, %v1876, 0
    %v2114 = vsel %vm1302, %v366, 0
    %v2117 = vsel %vm1302, %v367, 0
    %2119 = vmatprep.subr.mxu0 0.0
    %2120 = vmatpush1.xpose.msra.mxu0 %v2114
    %2121 = vmatprep.subr.mxu0 0.0
    %2122 = vmatpush1.xpose.msra.mxu0 %v2117
    %2123 = vmatprep.subr.mxu0 0.0
    %2124 = vmatpush1.xpose.msra.mxu0 0.0
    %2125 = vmatprep.subr.mxu0 0.0
    %2126 = vmatpush1.xpose.msra.mxu0 0.0
    %2127 = vmatprep.subr.mxu0 0.0
    %2128 = vmatpush1.xpose.msra.mxu0 0.0
    %2129 = vmatprep.subr.mxu0 0.0
    %2130 = vmatpush1.xpose.msra.mxu0 0.0
    %2131 = vmatprep.subr.mxu0 0.0
    %2132 = vmatpush1.xpose.msra.mxu0 0.0
    %2133 = vmatprep.subr.mxu0 0.0
    %2134 = vmatpush1.xpose.msra.mxu0 0.0
    %2135 = vmatprep.subr.mxu0 0.0
    %2136 = vmatpush1.xpose.msra.mxu0 0.0
    %2137 = vmatprep.subr.mxu0 0.0
    %2138 = vmatpush1.xpose.msra.mxu0 0.0
    %2139 = vmatprep.subr.mxu0 0.0
    %2140 = vmatpush1.xpose.msra.mxu0 0.0
    %2141 = vmatprep.subr.mxu0 0.0
    %2142 = vmatpush1.xpose.msra.mxu0 0.0
    %2143 = vmatprep.subr.mxu0 0.0
    %2144 = vmatpush1.xpose.msra.mxu0 0.0
    %2145 = vmatprep.subr.mxu0 0.0
    %2146 = vmatpush1.xpose.msra.mxu0 0.0
    %2147 = vmatprep.subr.mxu0 0.0
    %2148 = vmatpush1.xpose.msra.mxu0 0.0
    %2149 = vmatprep.subr.mxu0 0.0
    %2150 = vmatpush1.xpose.msra.mxu0 0.0
    %2151 = vmatprep.subr.mxu0 0.0
    %2152 = vmatpush1.xpose.msra.mxu0 0.0
    %2153 = vmatprep.subr.mxu0 0.0
    %2154 = vmatpush1.xpose.msra.mxu0 0.0
    %2155 = vmatprep.subr.mxu0 0.0
    %2156 = vmatpush1.xpose.msra.mxu0 0.0
    %2157 = vmatprep.subr.mxu0 0.0
    %2158 = vmatpush1.xpose.msra.mxu0 0.0
    %2159 = vmatprep.subr.mxu0 0.0
    %2160 = vmatpush1.xpose.msra.mxu0 0.0
    %2161 = vmatprep.subr.mxu0 0.0
    %2162 = vmatpush1.xpose.msra.mxu0 0.0
    %2163 = vmatprep.subr.mxu0 0.0
    %2164 = vmatpush1.xpose.msra.mxu0 0.0
    %2165 = vmatprep.subr.mxu0 0.0
    %2166 = vmatpush1.xpose.msra.mxu0 0.0
    %2167 = vmatprep.subr.mxu0 0.0
    %2168 = vmatpush1.xpose.msra.mxu0 0.0
    %2169 = vmatprep.subr.mxu0 0.0
    %2170 = vmatpush1.xpose.msra.mxu0 0.0
    %2171 = vmatprep.subr.mxu0 0.0
    %2172 = vmatpush1.xpose.msra.mxu0 0.0
    %2173 = vmatprep.subr.mxu0 0.0
    %2174 = vmatpush1.xpose.msra.mxu0 0.0
    %2175 = vmatprep.subr.mxu0 0.0
    %2176 = vmatpush1.xpose.msra.mxu0 0.0
    %2177 = vmatprep.subr.mxu0 0.0
    %2178 = vmatpush1.xpose.msra.mxu0 0.0
    %2179 = vmatprep.subr.mxu0 0.0
    %2180 = vmatpush1.xpose.msra.mxu0 0.0
    %2181 = vmatprep.subr.mxu0 0.0
    %2182 = vmatpush1.xpose.msra.mxu0 0.0
    %2183 = vmatprep.mubr.f32.mxu0 0.0
    %2184 = vmatmul.mubr.f32.gmra.mrb[0].mxu0 %v2111
    %v2185 = vpop.f32.mrb[0].mxu0
    %v2186 = vadd.f32 0.0, %v2185
    %v2187 = vpop.f32.mrb[0].mxu0
    %2188 = vdwg.mxu0
    %v2190 = vsel %vm1302, %v1949, 0
    %v2193 = vsel %vm1302, %v368, 0
    %v2196 = vsel %vm1302, %v369, 0
    %2198 = vmatprep.subr.mxu0 0.0
    %2199 = vmatpush1.xpose.msra.mxu0 %v2193
    %2200 = vmatprep.subr.mxu0 0.0
    %2201 = vmatpush1.xpose.msra.mxu0 %v2196
    %2202 = vmatprep.subr.mxu0 0.0
    %2203 = vmatpush1.xpose.msra.mxu0 0.0
    %2204 = vmatprep.subr.mxu0 0.0
    %2205 = vmatpush1.xpose.msra.mxu0 0.0
    %2206 = vmatprep.subr.mxu0 0.0
    %2207 = vmatpush1.xpose.msra.mxu0 0.0
    %2208 = vmatprep.subr.mxu0 0.0
    %2209 = vmatpush1.xpose.msra.mxu0 0.0
    %2210 = vmatprep.subr.mxu0 0.0
    %2211 = vmatpush1.xpose.msra.mxu0 0.0
    %2212 = vmatprep.subr.mxu0 0.0
    %2213 = vmatpush1.xpose.msra.mxu0 0.0
    %2214 = vmatprep.subr.mxu0 0.0
    %2215 = vmatpush1.xpose.msra.mxu0 0.0
    %2216 = vmatprep.subr.mxu0 0.0
    %2217 = vmatpush1.xpose.msra.mxu0 0.0
    %2218 = vmatprep.subr.mxu0 0.0
    %2219 = vmatpush1.xpose.msra.mxu0 0.0
    %2220 = vmatprep.subr.mxu0 0.0
    %2221 = vmatpush1.xpose.msra.mxu0 0.0
    %2222 = vmatprep.subr.mxu0 0.0
    %2223 = vmatpush1.xpose.msra.mxu0 0.0
    %2224 = vmatprep.subr.mxu0 0.0
    %2225 = vmatpush1.xpose.msra.mxu0 0.0
    %2226 = vmatprep.subr.mxu0 0.0
    %2227 = vmatpush1.xpose.msra.mxu0 0.0
    %2228 = vmatprep.subr.mxu0 0.0
    %2229 = vmatpush1.xpose.msra.mxu0 0.0
    %2230 = vmatprep.subr.mxu0 0.0
    %2231 = vmatpush1.xpose.msra.mxu0 0.0
    %2232 = vmatprep.subr.mxu0 0.0
    %2233 = vmatpush1.xpose.msra.mxu0 0.0
    %2234 = vmatprep.subr.mxu0 0.0
    %2235 = vmatpush1.xpose.msra.mxu0 0.0
    %2236 = vmatprep.subr.mxu0 0.0
    %2237 = vmatpush1.xpose.msra.mxu0 0.0
    %2238 = vmatprep.subr.mxu0 0.0
    %2239 = vmatpush1.xpose.msra.mxu0 0.0
    %2240 = vmatprep.subr.mxu0 0.0
    %2241 = vmatpush1.xpose.msra.mxu0 0.0
    %2242 = vmatprep.subr.mxu0 0.0
    %2243 = vmatpush1.xpose.msra.mxu0 0.0
    %2244 = vmatprep.subr.mxu0 0.0
    %2245 = vmatpush1.xpose.msra.mxu0 0.0
    %2246 = vmatprep.subr.mxu0 0.0
    %2247 = vmatpush1.xpose.msra.mxu0 0.0
    %2248 = vmatprep.subr.mxu0 0.0
    %2249 = vmatpush1.xpose.msra.mxu0 0.0
    %2250 = vmatprep.subr.mxu0 0.0
    %2251 = vmatpush1.xpose.msra.mxu0 0.0
    %2252 = vmatprep.subr.mxu0 0.0
    %2253 = vmatpush1.xpose.msra.mxu0 0.0
    %2254 = vmatprep.subr.mxu0 0.0
    %2255 = vmatpush1.xpose.msra.mxu0 0.0
    %2256 = vmatprep.subr.mxu0 0.0
    %2257 = vmatpush1.xpose.msra.mxu0 0.0
    %2258 = vmatprep.subr.mxu0 0.0
    %2259 = vmatpush1.xpose.msra.mxu0 0.0
    %2260 = vmatprep.subr.mxu0 0.0
    %2261 = vmatpush1.xpose.msra.mxu0 0.0
    %2262 = vmatprep.mubr.f32.mxu0 0.0
    %2263 = vmatmul.mubr.f32.gmra.mrb[0].mxu0 %v2190
    %v2264 = vpop.f32.mrb[0].mxu0
    %v2265 = vadd.f32 0.0, %v2264
    %v2266 = vpop.f32.mrb[0].mxu0
    %2267 = vdwg.mxu0
    %v2268 = vsel %vm35, %v2028, 0.0
    %v2269 = vsel %vm35, %v2107, 0.0
    %v2270 = vadd.f32 %v2268, %v2269
    %v2271 = vsel %vm35, %v2186, 0.0
    %v2272 = vadd.f32 %v2270, %v2271
    %v2273 = vsel %vm35, %v2265, 0.0
    %v2274 = vadd.f32 %v2272, %v2273
    %v2275 = vlaneseq
    %v2276 = vshrl.u32 %v2275, 7
    %v2277 = vsub.s32 0, %v2276
    %v2278 = vrot.slane %v29, %v2277
    %v2279 = vadd.f32 %v2274, %v2278
    %2280 = vst.msk [vmem:[#allocation2] sm:$0xff] %vm35, %v2279
    // Predicated region
    $region18: #{tpu_custom_call.1} parent=1 // pred_check
      _
    $region19: #{tpu_custom_call.1} parent=1 // pred_check_branch
      %2282 = sbr.rel (0) target = $region21
    $region20: #{tpu_custom_call.1} parent=1 // pred_region
      %s2284 = ssub.s32 128, 128
      %2285 = vsyncadd [#allocation3], %s2284
      %s2287 = sshll.u32 [#allocation2], 4
      %s2288 = int_to_ptr.vmem [resolvable:$true] %s2287
      %2290 = dma.vmem_to_hbm [thread:$0]  %s2288, 128, %s4, [#allocation3]
    $region21: #{tpu_custom_call.1} parent=1 // pred_fallthru
      _
    // Predicated region
    $region22: #{tpu_custom_call.1} parent=1 // pred_check
      _
    $region23: #{tpu_custom_call.1} parent=1 // pred_check_branch
      %2292 = sbr.rel (0) target = $region25
    $region24: #{tpu_custom_call.1} parent=1 // pred_region
      %2293 = dma.done [#allocation3], 128
    $region25: #{tpu_custom_call.1} parent=1 // pred_fallthru
      _
    %2294 = vsyncpa [#allocation3], 1

</llo_original>
